<compile_context>
chip_gen: v5e
topology: v5e:2x2
jax: 0.10.0
libtpu: 0.0.40
codegen_flags: <defaults>
</compile_context>

<pallas_src>
import jax
import jax.numpy as jnp
from jax import lax
from jax.experimental import pallas as pl
from jax.experimental.pallas import tpu as pltpu

EPS = 1e-5


def conv1x1_bn_kernel(x_ref, w_ref, gamma_ref, beta_ref, o_ref):
    # x_ref:     (Cin, M)       full flattened activations (same block every grid step)
    # w_ref:     (TILE_N, Cin)  Cout tile of the 1x1 conv weight
    # gamma_ref: (TILE_N, 1)    BN affine weight tile (f32)
    # beta_ref:  (TILE_N, 1)    BN affine bias tile   (f32)
    # o_ref:     (TILE_N, M)
    y = jnp.dot(w_ref[...], x_ref[...], preferred_element_type=jnp.float32)  # (TILE_N, M) f32

    m = y.shape[1]            # = N*H*W; the x block holds the full spatial extent
    inv_m = 1.0 / float(m)

    # Fused BatchNorm2d (training mode, biased variance): one reduction pass + one FMA pass.
    s1 = jnp.sum(y, axis=1, keepdims=True)          # (TILE_N, 1)
    s2 = jnp.sum(y * y, axis=1, keepdims=True)      # (TILE_N, 1)
    mean = s1 * inv_m
    var = jnp.maximum(s2 * inv_m - mean * mean, 0.0)
    inv_std = lax.rsqrt(var + EPS)
    scale = gamma_ref[...] * inv_std                # (TILE_N, 1)
    shift = beta_ref[...] - mean * scale            # (TILE_N, 1)

    o_ref[...] = (y * scale + shift).astype(o_ref.dtype)
    # TODO(synk): running_mean / running_var updates are not emitted (they do not
    # affect the forward output in training mode).


def conv1x1_bn(x_nchw, w_oihw, gamma, beta, *, tile_n=256, matmul_dtype=jnp.bfloat16):
    N, Cin, H, W = x_nchw.shape
    Cout = w_oihw.shape[0]
    M = N * H * W

    # NCHW -> (Cin, M); a pure reshape when N == 1 (the module's case).
    if N == 1:
        x_mat = x_nchw.reshape(Cin, M)
    else:
        x_mat = jnp.transpose(x_nchw, (1, 0, 2, 3)).reshape(Cin, M)
    w_mat = w_oihw.reshape(Cout, Cin)                       # OIHW 1x1 -> (Cout, Cin)
    gamma2d = gamma.reshape(Cout, 1).astype(jnp.float32)
    beta2d = beta.reshape(Cout, 1).astype(jnp.float32)

    if matmul_dtype is not None:                            # bf16 operands, f32 accumulate
        x_mat = x_mat.astype(matmul_dtype)
        w_mat = w_mat.astype(matmul_dtype)

    tile_n = min(tile_n, Cout)                              # full-dim block if Cout is tiny
    num_tiles = pl.cdiv(Cout, tile_n)                       # only the last tile is ragged

    y_mat = pl.pallas_call(
        conv1x1_bn_kernel,
        out_shape=jax.ShapeDtypeStruct((Cout, M), x_nchw.dtype),
        grid_spec=pl.GridSpec(
            grid=(num_tiles,),
            in_specs=[
                pl.BlockSpec((Cin, M), lambda j: (0, 0)),       # x: resident, re-used by all tiles
                pl.BlockSpec((tile_n, Cin), lambda j: (j, 0)),  # w: pipelined over Cout tiles
                pl.BlockSpec((tile_n, 1), lambda j: (j, 0)),
                pl.BlockSpec((tile_n, 1), lambda j: (j, 0)),
            ],
            out_specs=pl.BlockSpec((tile_n, M), lambda j: (j, 0)),
        ),
        compiler_params=pltpu.CompilerParams(
            dimension_semantics=("parallel",),                  # independent Cout tiles (2 TCs on v7x)
        ),
    )(x_mat, w_mat, gamma2d, beta2d)

    # (Cout, M) -> NCHW with no transpose when N == 1.
    if N == 1:
        return y_mat.reshape(1, Cout, H, W)
    return jnp.transpose(y_mat.reshape(Cout, N, H, W), (1, 0, 2, 3))


if __name__ == "__main__":
    # Shapes implied by the module: x [1, 272, 7, 7], conv 272 -> 1632 (1x1, no bias)
    N, Cin, H, W = 1, 272, 7, 7
    Cout = 1632

    key = jax.random.PRNGKey(0)
    kx, kw = jax.random.split(key)
    x = jax.random.normal(kx, (N, Cin, H, W), dtype=jnp.float32)
    w = jax.random.normal(kw, (Cout, Cin, 1, 1), dtype=jnp.float32) * 0.05
    # BatchNorm2d affine params: PyTorch defaults (weight=1, bias=0)
    gamma = jnp.ones((Cout,), dtype=jnp.float32)
    beta = jnp.zeros((Cout,), dtype=jnp.float32)

    out = conv1x1_bn(x, w, gamma, beta)
    jax.block_until_ready(out)
    assert out.shape == (N, Cout, H, W)

    # Loose sanity check against a pure-JAX f32 reference (kernel matmul runs in bf16).
    y_ref = jnp.einsum("oc,nchw->nohw", w.reshape(Cout, Cin), x)
    mean = y_ref.mean(axis=(0, 2, 3), keepdims=True)
    var = y_ref.var(axis=(0, 2, 3), keepdims=True)  # biased variance, as in BN training
    ref = (y_ref - mean) * lax.rsqrt(var + EPS) * gamma.reshape(1, -1, 1, 1) + beta.reshape(1, -1, 1, 1)
    err = float(jnp.max(jnp.abs(out - ref)))
    assert err < 1e-1, f"max abs err {err}"

    print("KERNEL_OK")
</pallas_src>

<mosaic_0001>
module attributes {stable_mosaic.version = 11 : i64} {
  func.func @conv1x1_bn_kernel(%arg0: i32, %arg1: memref<272x49xbf16, #tpu.memory_space<vmem>>, %arg2: memref<256x272xbf16, #tpu.memory_space<vmem>>, %arg3: memref<256x1xf32, #tpu.memory_space<vmem>>, %arg4: memref<256x1xf32, #tpu.memory_space<vmem>>, %arg5: memref<256x49xf32, #tpu.memory_space<vmem>>) attributes {dimension_semantics = [#tpu.dimension_semantics<parallel>], iteration_bounds = array<i64: 7>, scalar_prefetch = 0 : i64, scratch_operands = 0 : i64, tpu.core_type = #tpu.core_type<tc>, window_params = [{pipeline_mode = #tpu.pipeline_mode<synchronous>, transform_indices = @transform_0, window_bounds = array<i64: 272, 49>}, {transform_indices = @transform_1, window_bounds = array<i64: 256, 272>}, {transform_indices = @transform_2, window_bounds = array<i64: 256, 1>}, {transform_indices = @transform_3, window_bounds = array<i64: 256, 1>}, {transform_indices = @transform_4, window_bounds = array<i64: 256, 49>}]} {
    %c0 = arith.constant 0 : index
    %c0_0 = arith.constant 0 : index
    %0 = vector.load %arg2[%c0, %c0_0] : memref<256x272xbf16, #tpu.memory_space<vmem>>, vector<256x272xbf16>
    %c0_1 = arith.constant 0 : index
    %c0_2 = arith.constant 0 : index
    %1 = vector.load %arg1[%c0_1, %c0_2] : memref<272x49xbf16, #tpu.memory_space<vmem>>, vector<272x49xbf16>
    %cst = arith.constant dense<0.000000e+00> : vector<256x49xf32>
    %2 = tpu.matmul %0, %1, %cst {dimension_numbers = #tpu.dot_dimension_numbers<[1], [0], [0], [1], [0, 0, 1, 1], [], []>} : vector<256x272xbf16>, vector<272x49xbf16>, vector<256x49xf32> -> vector<256x49xf32>
    %cst_3 = arith.constant dense<0.000000e+00> : vector<256xf32>
    %3 = vector.multi_reduction <add>, %2, %cst_3 [1] : vector<256x49xf32> to vector<256xf32>
    %4 = vector.shape_cast %3 : vector<256xf32> to vector<256x1xf32>
    %5 = arith.mulf %2, %2 : vector<256x49xf32>
    %cst_4 = arith.constant dense<0.000000e+00> : vector<256xf32>
    %6 = vector.multi_reduction <add>, %5, %cst_4 [1] : vector<256x49xf32> to vector<256xf32>
    %7 = vector.shape_cast %6 : vector<256xf32> to vector<256x1xf32>
    %cst_5 = arith.constant 0.0204081628 : f32
    %8 = vector.broadcast %cst_5 : f32 to vector<256x1xf32>
    %9 = arith.mulf %4, %8 : vector<256x1xf32>
    %cst_6 = arith.constant 0.0204081628 : f32
    %10 = vector.broadcast %cst_6 : f32 to vector<256x1xf32>
    %11 = arith.mulf %7, %10 : vector<256x1xf32>
    %12 = arith.mulf %9, %9 : vector<256x1xf32>
    %13 = arith.subf %11, %12 : vector<256x1xf32>
    %cst_7 = arith.constant 0.000000e+00 : f32
    %14 = vector.broadcast %cst_7 : f32 to vector<256x1xf32>
    %15 = arith.maximumf %13, %14 : vector<256x1xf32>
    %cst_8 = arith.constant 9.99999974E-6 : f32
    %16 = vector.broadcast %cst_8 : f32 to vector<256x1xf32>
    %17 = arith.addf %15, %16 : vector<256x1xf32>
    %18 = math.rsqrt %17 : vector<256x1xf32>
    %c0_9 = arith.constant 0 : index
    %c0_10 = arith.constant 0 : index
    %19 = vector.load %arg3[%c0_9, %c0_10] : memref<256x1xf32, #tpu.memory_space<vmem>>, vector<256x1xf32>
    %20 = arith.mulf %19, %18 : vector<256x1xf32>
    %c0_11 = arith.constant 0 : index
    %c0_12 = arith.constant 0 : index
    %21 = vector.load %arg4[%c0_11, %c0_12] : memref<256x1xf32, #tpu.memory_space<vmem>>, vector<256x1xf32>
    %22 = arith.mulf %9, %20 : vector<256x1xf32>
    %23 = arith.subf %21, %22 : vector<256x1xf32>
    %24 = vector.broadcast %20 : vector<256x1xf32> to vector<256x49xf32>
    %25 = arith.mulf %2, %24 : vector<256x49xf32>
    %26 = vector.broadcast %23 : vector<256x1xf32> to vector<256x49xf32>
    %27 = arith.addf %25, %26 : vector<256x49xf32>
    %c0_13 = arith.constant 0 : index
    %c0_14 = arith.constant 0 : index
    %28 = vector.load %arg5[%c0_13, %c0_14] : memref<256x49xf32, #tpu.memory_space<vmem>>, vector<256x49xf32>
    tpu.vector_store %arg5[%c0_13, %c0_14], %27 {strides = array<i32>} : memref<256x49xf32, #tpu.memory_space<vmem>>, vector<256x49xf32>,
    return
  }
  func.func @transform_0(%arg0: i32) -> (i32, i32) {
    %c0_i32 = arith.constant 0 : i32
    %c0_i32_0 = arith.constant 0 : i32
    %c0_i32_1 = arith.constant 0 : i32
    return %c0_i32, %c0_i32_0 : i32, i32
  }
  func.func @transform_1(%arg0: i32) -> (i32, i32) {
    %c0_i32 = arith.constant 0 : i32
    %c0_i32_0 = arith.constant 0 : i32
    return %arg0, %c0_i32 : i32, i32
  }
  func.func @transform_2(%arg0: i32) -> (i32, i32) {
    %c0_i32 = arith.constant 0 : i32
    %c0_i32_0 = arith.constant 0 : i32
    return %arg0, %c0_i32 : i32, i32
  }
  func.func @transform_3(%arg0: i32) -> (i32, i32) {
    %c0_i32 = arith.constant 0 : i32
    %c0_i32_0 = arith.constant 0 : i32
    return %arg0, %c0_i32 : i32, i32
  }
  func.func @transform_4(%arg0: i32) -> (i32, i32) {
    %c0_i32 = arith.constant 0 : i32
    %c0_i32_0 = arith.constant 0 : i32
    return %arg0, %c0_i32 : i32, i32
  }
}

</mosaic_0001>

<llo_original>
// kernel: tpu_custom_call.1
$region0: #{tpu_custom_call.1}
  #allocation0 [shape = 'u32[]', space=smem, size = 0x4, offset = 0x4, fixed_abs, tag = 'smem constant byte address 0x4 - core index']
  #allocation1 [shape = 'u32[72,128]{1,0:T(1,128)}', space=vmem, size = 0x9000, scoped, tag = 'internal scratch']
  %s0 = inlined_call_operand.vmem [shape: bf16[272,49], index: 0, kind: input, shape index: {}]
  %s1 = inlined_call_operand.vmem [shape: bf16[1632,272], index: 1, kind: input, shape index: {}]
  %s2 = inlined_call_operand.vmem [shape: f32[1632,1], index: 2, kind: input, shape index: {}]
  %s3 = inlined_call_operand.vmem [shape: f32[1632,1], index: 3, kind: input, shape index: {}]
  %s4 = inlined_call_operand.vmem [shape: f32[1632,49], index: 4, kind: output, shape index: {}]
  %s5 = sld [smem:[#allocation0]]
  $region97: #{tpu_custom_call.1} parent=0
    _
  %s7 = ssub.s32 1, %s5
  %s8 = scalar_select 0, %s7, %s5
  $region1: #{tpu_custom_call.1} parent=0
    #allocation2 [shape = 'u8[262144]{0}', space=vmem, size = 0x40000, scoped, tag = 'output window, operand 0']
    loop: start=0, step=1, limit=9
    $region2: #{tpu_custom_call.1} parent=1 // loop_pre_header
      _
    $region3: #{tpu_custom_call.1} parent=1 // loop_header
      %s10 = sphi 0, %s14
      %p11 = scmp.ge.s32.totalorder %s10, 9
      %s18 = sphi 0, %s18
      %s20 = sphi 0, %s18
      %s21 = sphi 0, %s20
      %s35 = sphi 0, %s21
      %s41 = sphi 0, %s43
      %s44 = sphi 0, %s41
      %s45 = sphi 0, %s44
      %s61 = sphi 0, %s45
      %s67 = sphi 0, %s69
      %s70 = sphi 0, %s67
      %s71 = sphi 0, %s70
      %s87 = sphi 0, %s71
      %s93 = sphi 0, %s95
      %s96 = sphi 0, %s93
      %s97 = sphi 0, %s96
      %s113 = sphi 0, %s97
      %s119 = sphi 0, %s121
      %s122 = sphi 0, %s119
      %s123 = sphi 0, %s122
      %s139 = sphi 0, %s123
    $region4: #{tpu_custom_call.1} parent=1 // loop_header_branch
      %13 = sbr.rel (%p11) target = $region8
    $region5: #{tpu_custom_call.1} parent=1 // loop_body
      %s15 = ssub.s32 %s10, 1
      %s16 = ssub.s32 %s10, 2
      %s17 = sadd.s32 %s10, 1
      %s19 = sadd.s32 %s18, 1
      %p22 = scmp.eq.s32.totalorder %s10, 6
      %p23 = scmp.ne.s32.totalorder %s18, %s20
      %p24 = scmp.eq.s32.totalorder %s10, 0
      %p25 = por %p23, %p24
      %p26 = scmp.ne.s32.totalorder %s18, %s20
      %p27 = scmp.eq.s32.totalorder %s15, 6
      %p28 = por %p26, %p27
      %p29 = scmp.ne.s32.totalorder %s20, %s21
      %p30 = scmp.eq.s32.totalorder %s15, 0
      %p31 = por %p29, %p30
      %p32 = scmp.ne.s32.totalorder %s20, %s21
      %p33 = scmp.eq.s32.totalorder %s16, 6
      %p34 = por %p32, %p33
      %p36 = scmp.ne.s32.totalorder %s21, %s35
      %p37 = scmp.eq.s32.totalorder %s16, 0
      %p38 = por %p36, %p37
      %s39 = ssub.s32 %s10, %s17
      %p40 = scmp.eq.s32.totalorder %s39, 0
      %s42 = sadd.s32 %s41, 1
      %s43 = scalar_select %p40, %s41, %s42
      %p46 = pneg %p40
      %p47 = scmp.eq.s32.totalorder %s10, 6
      %p48 = por %p46, %p47
      %p49 = scmp.ne.s32.totalorder %s41, %s44
      %p50 = scmp.eq.s32.totalorder %s10, 0
      %p51 = por %p49, %p50
      %p52 = scmp.ne.s32.totalorder %s41, %s44
      %p53 = scmp.eq.s32.totalorder %s15, 6
      %p54 = por %p52, %p53
      %p55 = scmp.ne.s32.totalorder %s44, %s45
      %p56 = scmp.eq.s32.totalorder %s15, 0
      %p57 = por %p55, %p56
      %p58 = scmp.ne.s32.totalorder %s44, %s45
      %p59 = scmp.eq.s32.totalorder %s16, 6
      %p60 = por %p58, %p59
      %p62 = scmp.ne.s32.totalorder %s45, %s61
      %p63 = scmp.eq.s32.totalorder %s16, 0
      %p64 = por %p62, %p63
      %s65 = ssub.s32 %s10, %s17
      %p66 = scmp.eq.s32.totalorder %s65, 0
      %s68 = sadd.s32 %s67, 1
      %s69 = scalar_select %p66, %s67, %s68
      %p72 = pneg %p66
      %p73 = scmp.eq.s32.totalorder %s10, 6
      %p74 = por %p72, %p73
      %p75 = scmp.ne.s32.totalorder %s67, %s70
      %p76 = scmp.eq.s32.totalorder %s10, 0
      %p77 = por %p75, %p76
      %p78 = scmp.ne.s32.totalorder %s67, %s70
      %p79 = scmp.eq.s32.totalorder %s15, 6
      %p80 = por %p78, %p79
      %p81 = scmp.ne.s32.totalorder %s70, %s71
      %p82 = scmp.eq.s32.totalorder %s15, 0
      %p83 = por %p81, %p82
      %p84 = scmp.ne.s32.totalorder %s70, %s71
      %p85 = scmp.eq.s32.totalorder %s16, 6
      %p86 = por %p84, %p85
      %p88 = scmp.ne.s32.totalorder %s71, %s87
      %p89 = scmp.eq.s32.totalorder %s16, 0
      %p90 = por %p88, %p89
      %s91 = ssub.s32 %s10, %s17
      %p92 = scmp.eq.s32.totalorder %s91, 0
      %s94 = sadd.s32 %s93, 1
      %s95 = scalar_select %p92, %s93, %s94
      %p98 = pneg %p92
      %p99 = scmp.eq.s32.totalorder %s10, 6
      %p100 = por %p98, %p99
      %p101 = scmp.ne.s32.totalorder %s93, %s96
      %p102 = scmp.eq.s32.totalorder %s10, 0
      %p103 = por %p101, %p102
      %p104 = scmp.ne.s32.totalorder %s93, %s96
      %p105 = scmp.eq.s32.totalorder %s15, 6
      %p106 = por %p104, %p105
      %p107 = scmp.ne.s32.totalorder %s96, %s97
      %p108 = scmp.eq.s32.totalorder %s15, 0
      %p109 = por %p107, %p108
      %p110 = scmp.ne.s32.totalorder %s96, %s97
      %p111 = scmp.eq.s32.totalorder %s16, 6
      %p112 = por %p110, %p111
      %p114 = scmp.ne.s32.totalorder %s97, %s113
      %p115 = scmp.eq.s32.totalorder %s16, 0
      %p116 = por %p114, %p115
      %s117 = ssub.s32 %s10, %s17
      %p118 = scmp.eq.s32.totalorder %s117, 0
      %s120 = sadd.s32 %s119, 1
      %s121 = scalar_select %p118, %s119, %s120
      %p124 = pneg %p118
      %p125 = scmp.eq.s32.totalorder %s10, 6
      %p126 = por %p124, %p125
      %p127 = scmp.ne.s32.totalorder %s119, %s122
      %p128 = scmp.eq.s32.totalorder %s10, 0
      %p129 = por %p127, %p128
      %p130 = scmp.ne.s32.totalorder %s119, %s122
      %p131 = scmp.eq.s32.totalorder %s15, 6
      %p132 = por %p130, %p131
      %p133 = scmp.ne.s32.totalorder %s122, %s123
      %p134 = scmp.eq.s32.totalorder %s15, 0
      %p135 = por %p133, %p134
      %p136 = scmp.ne.s32.totalorder %s122, %s123
      %p137 = scmp.eq.s32.totalorder %s16, 6
      %p138 = por %p136, %p137
      %p140 = scmp.ne.s32.totalorder %s123, %s139
      %p141 = scmp.eq.s32.totalorder %s16, 0
      %p142 = por %p140, %p141
      %p143 = scmp.le.s32.totalorder 1, %s10
      %p144 = scmp.lt.s32.totalorder %s10, 8
      %p145 = pnand %p143, %p144
      %p146 = pneg %p145
      // Predicated region
      $region9: #{tpu_custom_call.1} parent=5 // pred_check
        _
      $region10: #{tpu_custom_call.1} parent=5 // pred_check_branch
        %148 = sbr.rel (%p145) target = $region12
      $region11: #{tpu_custom_call.1} parent=5 // pred_region
        %s149 = ssub.s32 %s10, 1
        // Predicated region
        $region13: #{tpu_custom_call.1} parent=11 // pred_check
          %p150 = pneg %p31
        $region14: #{tpu_custom_call.1} parent=11 // pred_check_branch
          %152 = sbr.rel (%p150) target = $region16
        $region15: #{tpu_custom_call.1} parent=11 // pred_region
          _
        $region16: #{tpu_custom_call.1} parent=11 // pred_fallthru
          _
      $region12: #{tpu_custom_call.1} parent=5 // pred_fallthru
        _
      %p153 = scmp.lt.s32.totalorder %s10, 7
      // Predicated region
      $region17: #{tpu_custom_call.1} parent=5 // pred_check
        %p154 = pneg %p153
      $region18: #{tpu_custom_call.1} parent=5 // pred_check_branch
        %156 = sbr.rel (%p154) target = $region20
      $region19: #{tpu_custom_call.1} parent=5 // pred_region
        // Predicated region
        $region21: #{tpu_custom_call.1} parent=19 // pred_check
          %p157 = pneg %p51
        $region22: #{tpu_custom_call.1} parent=19 // pred_check_branch
          %159 = sbr.rel (%p157) target = $region24
        $region23: #{tpu_custom_call.1} parent=19 // pred_region
          %s160 = smul.u32 32, %s10
          %s161 = ssub.s32 204, %s160
          %p162 = scmp.lt.s32.totalorder %s161, 32
          %s163 = scalar_select %p162, %s161, 32
          %s164 = smul.u32 4, %s163
          %s165 = smul.u32 %s164, 3
          %p166 = scmp.lt.s32.totalorder %s160, 203
          %s167 = scalar_select %p166, %s160, 203
          %s168 = smul.addr %s167, 3
          %s169 = smul.addr %s168, 4
          %s170 = scalar_lea.vmem %s1, %s169
          %s171 = smul.u32 32, %s10
          %s172 = ssub.s32 204, %s171
          %p173 = scmp.lt.s32.totalorder %s172, 32
          %s174 = scalar_select %p173, %s172, 32
          %s175 = smul.u32 4, %s174
          %s176 = smul.u32 %s175, 3
        $region24: #{tpu_custom_call.1} parent=19 // pred_fallthru
          _
        // Predicated region
        $region25: #{tpu_custom_call.1} parent=19 // pred_check
          %p177 = pneg %p77
        $region26: #{tpu_custom_call.1} parent=19 // pred_check_branch
          %179 = sbr.rel (%p177) target = $region28
        $region27: #{tpu_custom_call.1} parent=19 // pred_region
          %s180 = smul.u32 32, %s10
          %s181 = ssub.s32 204, %s180
          %p182 = scmp.lt.s32.totalorder %s181, 32
          %s183 = scalar_select %p182, %s181, 32
          %s184 = smul.u32 8, %s183
          %p185 = scmp.lt.s32.totalorder %s180, 203
          %s186 = scalar_select %p185, %s180, 203
          %s187 = smul.addr %s186, 8
          %s188 = scalar_lea.vmem %s2, %s187
          %s189 = smul.u32 32, %s10
          %s190 = ssub.s32 204, %s189
          %p191 = scmp.lt.s32.totalorder %s190, 32
          %s192 = scalar_select %p191, %s190, 32
          %s193 = smul.u32 8, %s192
        $region28: #{tpu_custom_call.1} parent=19 // pred_fallthru
          _
        // Predicated region
        $region29: #{tpu_custom_call.1} parent=19 // pred_check
          %p194 = pneg %p103
        $region30: #{tpu_custom_call.1} parent=19 // pred_check_branch
          %196 = sbr.rel (%p194) target = $region32
        $region31: #{tpu_custom_call.1} parent=19 // pred_region
          %s197 = smul.u32 32, %s10
          %s198 = ssub.s32 204, %s197
          %p199 = scmp.lt.s32.totalorder %s198, 32
          %s200 = scalar_select %p199, %s198, 32
          %s201 = smul.u32 8, %s200
          %p202 = scmp.lt.s32.totalorder %s197, 203
          %s203 = scalar_select %p202, %s197, 203
          %s204 = smul.addr %s203, 8
          %s205 = scalar_lea.vmem %s3, %s204
          %s206 = smul.u32 32, %s10
          %s207 = ssub.s32 204, %s206
          %p208 = scmp.lt.s32.totalorder %s207, 32
          %s209 = scalar_select %p208, %s207, 32
          %s210 = smul.u32 8, %s209
        $region32: #{tpu_custom_call.1} parent=19 // pred_fallthru
          _
      $region20: #{tpu_custom_call.1} parent=5 // pred_fallthru
        _
      %p211 = scmp.le.s32.totalorder 1, %s10
      %p212 = scmp.lt.s32.totalorder %s10, 8
      %p213 = pnand %p211, %p212
      %p214 = pneg %p213
      // Predicated region
      $region33: #{tpu_custom_call.1} parent=5 // pred_check
        _
      $region34: #{tpu_custom_call.1} parent=5 // pred_check_branch
        %216 = sbr.rel (%p213) target = $region36
      $region35: #{tpu_custom_call.1} parent=5 // pred_region
        %s217 = ssub.s32 %s10, 1
        %p218 = pneg %p31
        %p219 = pneg %p28
        %s220 = smul.u32 32, %s15
        %s221 = ssub.s32 204, %s220
        %p222 = scmp.lt.s32.totalorder %s221, 32
        %s223 = scalar_select %p222, %s221, 32
        %s224 = smul.u32 4, %s223
        %s225 = smul.u32 %s224, 3
        %p226 = scmp.lt.s32.totalorder %s220, 203
        %s227 = scalar_select %p226, %s220, 203
        %s228 = smul.addr %s227, 3
        %s229 = smul.addr %s228, 4
        %s230 = scalar_lea.vmem %s1, %s229
        %p231 = pneg %p57
        %p232 = pneg %p54
        %s233 = smul.u32 32, %s15
        %s234 = ssub.s32 204, %s233
        %p235 = scmp.lt.s32.totalorder %s234, 32
        %s236 = scalar_select %p235, %s234, 32
        %s237 = smul.u32 8, %s236
        %p238 = scmp.lt.s32.totalorder %s233, 203
        %s239 = scalar_select %p238, %s233, 203
        %s240 = smul.addr %s239, 8
        %s241 = scalar_lea.vmem %s2, %s240
        %p242 = pneg %p83
        %p243 = pneg %p80
        %s244 = smul.u32 32, %s15
        %s245 = ssub.s32 204, %s244
        %p246 = scmp.lt.s32.totalorder %s245, 32
        %s247 = scalar_select %p246, %s245, 32
        %s248 = smul.u32 8, %s247
        %p249 = scmp.lt.s32.totalorder %s244, 203
        %s250 = scalar_select %p249, %s244, 203
        %s251 = smul.addr %s250, 8
        %s252 = scalar_lea.vmem %s3, %s251
        %p253 = pneg %p109
        %p254 = pneg %p106
        %p255 = pneg %p135
        %p256 = pneg %p132
        %s257 = sand.u32 %s122, 1
        %s258 = sand.u32 %s122, 1
        %s259 = smul.addr %s258, 256
        %s260 = scalar_lea.vmem [#allocation2], %s259
        %s261 = smul.u32 32, %s15
        %s262 = ssub.s32 204, %s261
        %p263 = scmp.lt.s32.totalorder %s262, 32
        %s264 = scalar_select %p263, %s262, 32
        %s265 = smul.u32 4, %s264
        %s266 = smul.u32 %s265, 3
        %p267 = scmp.lt.s32.totalorder %s261, 203
        %s268 = scalar_select %p267, %s261, 203
        %s269 = smul.addr %s268, 3
        %s270 = smul.addr %s269, 4
        %s271 = scalar_lea.vmem %s1, %s270
        %s272 = smul.u32 32, %s15
        %s273 = ssub.s32 204, %s272
        %p274 = scmp.lt.s32.totalorder %s273, 32
        %s275 = scalar_select %p274, %s273, 32
        %s276 = smul.u32 4, %s275
        %s277 = smul.u32 %s276, 3
        %s278 = smul.u32 32, %s15
        %s279 = ssub.s32 204, %s278
        %p280 = scmp.lt.s32.totalorder %s279, 32
        %s281 = scalar_select %p280, %s279, 32
        %s282 = smul.u32 8, %s281
        %p283 = scmp.lt.s32.totalorder %s278, 203
        %s284 = scalar_select %p283, %s278, 203
        %s285 = smul.addr %s284, 8
        %s286 = scalar_lea.vmem %s2, %s285
        %s287 = smul.u32 32, %s15
        %s288 = ssub.s32 204, %s287
        %p289 = scmp.lt.s32.totalorder %s288, 32
        %s290 = scalar_select %p289, %s288, 32
        %s291 = smul.u32 8, %s290
        %s292 = smul.u32 32, %s15
        %s293 = ssub.s32 204, %s292
        %p294 = scmp.lt.s32.totalorder %s293, 32
        %s295 = scalar_select %p294, %s293, 32
        %s296 = smul.u32 8, %s295
        %p297 = scmp.lt.s32.totalorder %s292, 203
        %s298 = scalar_select %p297, %s292, 203
        %s299 = smul.addr %s298, 8
        %s300 = scalar_lea.vmem %s3, %s299
        %s301 = smul.u32 32, %s15
        %s302 = ssub.s32 204, %s301
        %p303 = scmp.lt.s32.totalorder %s302, 32
        %s304 = scalar_select %p303, %s302, 32
        %s305 = smul.u32 8, %s304
        %s306 = smul.u32 32, %s15
        %s307 = ssub.s32 204, %s306
        %p308 = scmp.lt.s32.totalorder %s307, 32
        %s309 = scalar_select %p308, %s307, 32
        %s310 = smul.u32 8, %s309
        %v312 = vld [vmem:[%s271] sm:$0xff]
        %v313 = vld [vmem:[%s271 + $0x8] sm:$0xf]
        %v314 = vld [vmem:[%s271 + $0xc] sm:$0xff]
        %v315 = vld [vmem:[%s271 + $0x14] sm:$0xf]
        %v316 = vld [vmem:[%s271 + $0x18] sm:$0xff]
        %v317 = vld [vmem:[%s271 + $0x20] sm:$0xf]
        %v318 = vld [vmem:[%s271 + $0x24] sm:$0xff]
        %v319 = vld [vmem:[%s271 + $0x2c] sm:$0xf]
        %v320 = vld [vmem:[%s271 + $0x30] sm:$0xff]
        %v321 = vld [vmem:[%s271 + $0x38] sm:$0xf]
        %v322 = vld [vmem:[%s271 + $0x3c] sm:$0xff]
        %v323 = vld [vmem:[%s271 + $0x44] sm:$0xf]
        %v324 = vld [vmem:[%s271 + $0x48] sm:$0xff]
        %v325 = vld [vmem:[%s271 + $0x50] sm:$0xf]
        %v326 = vld [vmem:[%s271 + $0x54] sm:$0xff]
        %v327 = vld [vmem:[%s271 + $0x5c] sm:$0xf]
        %v328 = vld [vmem:[%s271 + $0x60] sm:$0xff]
        %v329 = vld [vmem:[%s271 + $0x68] sm:$0xf]
        %v330 = vld [vmem:[%s271 + $0x6c] sm:$0xff]
        %v331 = vld [vmem:[%s271 + $0x74] sm:$0xf]
        %v332 = vld [vmem:[%s271 + $0x78] sm:$0xff]
        %v333 = vld [vmem:[%s271 + $0x80] sm:$0xf]
        %v334 = vld [vmem:[%s271 + $0x84] sm:$0xff]
        %v335 = vld [vmem:[%s271 + $0x8c] sm:$0xf]
        %v336 = vld [vmem:[%s271 + $0x90] sm:$0xff]
        %v337 = vld [vmem:[%s271 + $0x98] sm:$0xf]
        %v338 = vld [vmem:[%s271 + $0x9c] sm:$0xff]
        %v339 = vld [vmem:[%s271 + $0xa4] sm:$0xf]
        %v340 = vld [vmem:[%s271 + $0xa8] sm:$0xff]
        %v341 = vld [vmem:[%s271 + $0xb0] sm:$0xf]
        %v342 = vld [vmem:[%s271 + $0xb4] sm:$0xff]
        %v343 = vld [vmem:[%s271 + $0xbc] sm:$0xf]
        %v344 = vld [vmem:[%s271 + $0xc0] sm:$0xff]
        %v345 = vld [vmem:[%s271 + $0xc8] sm:$0xf]
        %v346 = vld [vmem:[%s271 + $0xcc] sm:$0xff]
        %v347 = vld [vmem:[%s271 + $0xd4] sm:$0xf]
        %v348 = vld [vmem:[%s271 + $0xd8] sm:$0xff]
        %v349 = vld [vmem:[%s271 + $0xe0] sm:$0xf]
        %v350 = vld [vmem:[%s271 + $0xe4] sm:$0xff]
        %v351 = vld [vmem:[%s271 + $0xec] sm:$0xf]
        %v352 = vld [vmem:[%s271 + $0xf0] sm:$0xff]
        %v353 = vld [vmem:[%s271 + $0xf8] sm:$0xf]
        %v354 = vld [vmem:[%s271 + $0xfc] sm:$0xff]
        %v355 = vld [vmem:[%s271 + $0x104] sm:$0xf]
        %v356 = vld [vmem:[%s271 + $0x108] sm:$0xff]
        %v357 = vld [vmem:[%s271 + $0x110] sm:$0xf]
        %v358 = vld [vmem:[%s271 + $0x114] sm:$0xff]
        %v359 = vld [vmem:[%s271 + $0x11c] sm:$0xf]
        %v360 = vld [vmem:[%s271 + $0x120] sm:$0xff]
        %v361 = vld [vmem:[%s271 + $0x128] sm:$0xf]
        %v362 = vld [vmem:[%s271 + $0x12c] sm:$0xff]
        %v363 = vld [vmem:[%s271 + $0x134] sm:$0xf]
        %v364 = vld [vmem:[%s271 + $0x138] sm:$0xff]
        %v365 = vld [vmem:[%s271 + $0x140] sm:$0xf]
        %v366 = vld [vmem:[%s271 + $0x144] sm:$0xff]
        %v367 = vld [vmem:[%s271 + $0x14c] sm:$0xf]
        %v368 = vld [vmem:[%s271 + $0x150] sm:$0xff]
        %v369 = vld [vmem:[%s271 + $0x158] sm:$0xf]
        %v370 = vld [vmem:[%s271 + $0x15c] sm:$0xff]
        %v371 = vld [vmem:[%s271 + $0x164] sm:$0xf]
        %v372 = vld [vmem:[%s271 + $0x168] sm:$0xff]
        %v373 = vld [vmem:[%s271 + $0x170] sm:$0xf]
        %v374 = vld [vmem:[%s271 + $0x174] sm:$0xff]
        %v375 = vld [vmem:[%s271 + $0x17c] sm:$0xf]
        %v376 = vld [vmem:[%s0] sm:$0xf]
        %v377 = vld [vmem:[%s0 + $0x4] sm:$0xf]
        %v378 = vld [vmem:[%s0 + $0x8] sm:$0xf]
        %v379 = vld [vmem:[%s0 + $0xc] sm:$0xf]
        %v380 = vld [vmem:[%s0 + $0x10] sm:$0xf]
        %v381 = vld [vmem:[%s0 + $0x14] sm:$0xf]
        %v382 = vld [vmem:[%s0 + $0x18] sm:$0xf]
        %v383 = vld [vmem:[%s0 + $0x1c] sm:$0xf]
        %v384 = vld [vmem:[%s0 + $0x20] sm:$0xf]
        %v385 = vld [vmem:[%s0 + $0x24] sm:$0xf]
        %v386 = vld [vmem:[%s0 + $0x28] sm:$0xf]
        %v387 = vld [vmem:[%s0 + $0x2c] sm:$0xf]
        %v388 = vld [vmem:[%s0 + $0x30] sm:$0xf]
        %v389 = vld [vmem:[%s0 + $0x34] sm:$0xf]
        %v390 = vld [vmem:[%s0 + $0x38] sm:$0xf]
        %v391 = vld [vmem:[%s0 + $0x3c] sm:$0xf]
        %v392 = vld [vmem:[%s0 + $0x40] sm:$0xf]
        %v393 = vld [vmem:[%s0 + $0x44] sm:$0xf]
        %v394 = vld [vmem:[%s0 + $0x48] sm:$0xf]
        %v395 = vld [vmem:[%s0 + $0x4c] sm:$0xf]
        %v396 = vld [vmem:[%s0 + $0x50] sm:$0xf]
        %v397 = vld [vmem:[%s0 + $0x54] sm:$0xf]
        %v398 = vld [vmem:[%s0 + $0x58] sm:$0xf]
        %v399 = vld [vmem:[%s0 + $0x5c] sm:$0xf]
        %v400 = vld [vmem:[%s0 + $0x60] sm:$0xf]
        %v401 = vld [vmem:[%s0 + $0x64] sm:$0xf]
        %v402 = vld [vmem:[%s0 + $0x68] sm:$0xf]
        %v403 = vld [vmem:[%s0 + $0x6c] sm:$0xf]
        %v404 = vld [vmem:[%s0 + $0x70] sm:$0xf]
        %v405 = vld [vmem:[%s0 + $0x74] sm:$0xf]
        %v406 = vld [vmem:[%s0 + $0x78] sm:$0xf]
        %v407 = vld [vmem:[%s0 + $0x7c] sm:$0xf]
        %v408 = vld [vmem:[%s0 + $0x80] sm:$0xf]
        %v409 = vld [vmem:[%s0 + $0x84] sm:$0xf]
        %v474 = vunpack.c.l.b16 %v312
        %v475 = vunpack.c.h.b16 %v312
        %v476 = vunpack.c.l.b16 %v313
        %v477 = vunpack.c.l.b16 %v314
        %v478 = vunpack.c.h.b16 %v314
        %v479 = vunpack.c.l.b16 %v315
        %v480 = vunpack.c.l.b16 %v316
        %v481 = vunpack.c.h.b16 %v316
        %v482 = vunpack.c.l.b16 %v317
        %v483 = vunpack.c.l.b16 %v318
        %v484 = vunpack.c.h.b16 %v318
        %v485 = vunpack.c.l.b16 %v319
        %v486 = vunpack.c.l.b16 %v320
        %v487 = vunpack.c.h.b16 %v320
        %v488 = vunpack.c.l.b16 %v321
        %v489 = vunpack.c.l.b16 %v322
        %v490 = vunpack.c.h.b16 %v322
        %v491 = vunpack.c.l.b16 %v323
        %v492 = vunpack.c.l.b16 %v324
        %v493 = vunpack.c.h.b16 %v324
        %v494 = vunpack.c.l.b16 %v325
        %v495 = vunpack.c.l.b16 %v326
        %v496 = vunpack.c.h.b16 %v326
        %v497 = vunpack.c.l.b16 %v327
        %v498 = vunpack.c.l.b16 %v328
        %v499 = vunpack.c.h.b16 %v328
        %v500 = vunpack.c.l.b16 %v329
        %v501 = vunpack.c.l.b16 %v330
        %v502 = vunpack.c.h.b16 %v330
        %v503 = vunpack.c.l.b16 %v331
        %v504 = vunpack.c.l.b16 %v332
        %v505 = vunpack.c.h.b16 %v332
        %v506 = vunpack.c.l.b16 %v333
        %v507 = vunpack.c.l.b16 %v334
        %v508 = vunpack.c.h.b16 %v334
        %v509 = vunpack.c.l.b16 %v335
        %v510 = vunpack.c.l.b16 %v336
        %v511 = vunpack.c.h.b16 %v336
        %v512 = vunpack.c.l.b16 %v337
        %v513 = vunpack.c.l.b16 %v338
        %v514 = vunpack.c.h.b16 %v338
        %v515 = vunpack.c.l.b16 %v339
        %v516 = vunpack.c.l.b16 %v340
        %v517 = vunpack.c.h.b16 %v340
        %v518 = vunpack.c.l.b16 %v341
        %v519 = vunpack.c.l.b16 %v342
        %v520 = vunpack.c.h.b16 %v342
        %v521 = vunpack.c.l.b16 %v343
        %v522 = vunpack.c.l.b16 %v344
        %v523 = vunpack.c.h.b16 %v344
        %v524 = vunpack.c.l.b16 %v345
        %v525 = vunpack.c.l.b16 %v346
        %v526 = vunpack.c.h.b16 %v346
        %v527 = vunpack.c.l.b16 %v347
        %v528 = vunpack.c.l.b16 %v348
        %v529 = vunpack.c.h.b16 %v348
        %v530 = vunpack.c.l.b16 %v349
        %v531 = vunpack.c.l.b16 %v350
        %v532 = vunpack.c.h.b16 %v350
        %v533 = vunpack.c.l.b16 %v351
        %v534 = vunpack.c.l.b16 %v352
        %v535 = vunpack.c.h.b16 %v352
        %v536 = vunpack.c.l.b16 %v353
        %v537 = vunpack.c.l.b16 %v354
        %v538 = vunpack.c.h.b16 %v354
        %v539 = vunpack.c.l.b16 %v355
        %v540 = vunpack.c.l.b16 %v356
        %v541 = vunpack.c.h.b16 %v356
        %v542 = vunpack.c.l.b16 %v357
        %v543 = vunpack.c.l.b16 %v358
        %v544 = vunpack.c.h.b16 %v358
        %v545 = vunpack.c.l.b16 %v359
        %v546 = vunpack.c.l.b16 %v360
        %v547 = vunpack.c.h.b16 %v360
        %v548 = vunpack.c.l.b16 %v361
        %v549 = vunpack.c.l.b16 %v362
        %v550 = vunpack.c.h.b16 %v362
        %v551 = vunpack.c.l.b16 %v363
        %v552 = vunpack.c.l.b16 %v364
        %v553 = vunpack.c.h.b16 %v364
        %v554 = vunpack.c.l.b16 %v365
        %v555 = vunpack.c.l.b16 %v366
        %v556 = vunpack.c.h.b16 %v366
        %v557 = vunpack.c.l.b16 %v367
        %v558 = vunpack.c.l.b16 %v368
        %v559 = vunpack.c.h.b16 %v368
        %v560 = vunpack.c.l.b16 %v369
        %v561 = vunpack.c.l.b16 %v370
        %v562 = vunpack.c.h.b16 %v370
        %v563 = vunpack.c.l.b16 %v371
        %v564 = vunpack.c.l.b16 %v372
        %v565 = vunpack.c.h.b16 %v372
        %v566 = vunpack.c.l.b16 %v373
        %v567 = vunpack.c.l.b16 %v374
        %v568 = vunpack.c.h.b16 %v374
        %v569 = vunpack.c.l.b16 %v375
        %v570 = vpack.c.b16 %v477, %v474
        %v571 = vpack.c.b16 %v478, %v475
        %v572 = vpack.c.b16 %v479, %v476
        %v573 = vpack.c.b16 %v483, %v480
        %v574 = vpack.c.b16 %v484, %v481
        %v575 = vpack.c.b16 %v485, %v482
        %v576 = vpack.c.b16 %v489, %v486
        %v577 = vpack.c.b16 %v490, %v487
        %v578 = vpack.c.b16 %v491, %v488
        %v579 = vpack.c.b16 %v495, %v492
        %v580 = vpack.c.b16 %v496, %v493
        %v581 = vpack.c.b16 %v497, %v494
        %v582 = vpack.c.b16 %v501, %v498
        %v583 = vpack.c.b16 %v502, %v499
        %v584 = vpack.c.b16 %v503, %v500
        %v585 = vpack.c.b16 %v507, %v504
        %v586 = vpack.c.b16 %v508, %v505
        %v587 = vpack.c.b16 %v509, %v506
        %v588 = vpack.c.b16 %v513, %v510
        %v589 = vpack.c.b16 %v514, %v511
        %v590 = vpack.c.b16 %v515, %v512
        %v591 = vpack.c.b16 %v519, %v516
        %v592 = vpack.c.b16 %v520, %v517
        %v593 = vpack.c.b16 %v521, %v518
        %v594 = vpack.c.b16 %v525, %v522
        %v595 = vpack.c.b16 %v526, %v523
        %v596 = vpack.c.b16 %v527, %v524
        %v597 = vpack.c.b16 %v531, %v528
        %v598 = vpack.c.b16 %v532, %v529
        %v599 = vpack.c.b16 %v533, %v530
        %v600 = vpack.c.b16 %v537, %v534
        %v601 = vpack.c.b16 %v538, %v535
        %v602 = vpack.c.b16 %v539, %v536
        %v603 = vpack.c.b16 %v543, %v540
        %v604 = vpack.c.b16 %v544, %v541
        %v605 = vpack.c.b16 %v545, %v542
        %v606 = vpack.c.b16 %v549, %v546
        %v607 = vpack.c.b16 %v550, %v547
        %v608 = vpack.c.b16 %v551, %v548
        %v609 = vpack.c.b16 %v555, %v552
        %v610 = vpack.c.b16 %v556, %v553
        %v611 = vpack.c.b16 %v557, %v554
        %v612 = vpack.c.b16 %v561, %v558
        %v613 = vpack.c.b16 %v562, %v559
        %v614 = vpack.c.b16 %v563, %v560
        %v615 = vpack.c.b16 %v567, %v564
        %v616 = vpack.c.b16 %v568, %v565
        %v617 = vpack.c.b16 %v569, %v566
        %v684 = vunpack.c.l.b16 %v376
        %v685 = vunpack.c.l.b16 %v377
        %v686 = vunpack.c.l.b16 %v378
        %v687 = vunpack.c.l.b16 %v379
        %v688 = vunpack.c.l.b16 %v380
        %v689 = vunpack.c.l.b16 %v381
        %v690 = vunpack.c.l.b16 %v382
        %v691 = vunpack.c.l.b16 %v383
        %v692 = vunpack.c.l.b16 %v384
        %v693 = vunpack.c.l.b16 %v385
        %v694 = vunpack.c.l.b16 %v386
        %v695 = vunpack.c.l.b16 %v387
        %v696 = vunpack.c.l.b16 %v388
        %v697 = vunpack.c.l.b16 %v389
        %v698 = vunpack.c.l.b16 %v390
        %v699 = vunpack.c.l.b16 %v391
        %v700 = vunpack.c.l.b16 %v392
        %v701 = vunpack.c.l.b16 %v393
        %v702 = vunpack.c.l.b16 %v394
        %v703 = vunpack.c.l.b16 %v395
        %v704 = vunpack.c.l.b16 %v396
        %v705 = vunpack.c.l.b16 %v397
        %v706 = vunpack.c.l.b16 %v398
        %v707 = vunpack.c.l.b16 %v399
        %v708 = vunpack.c.l.b16 %v400
        %v709 = vunpack.c.l.b16 %v401
        %v710 = vunpack.c.l.b16 %v402
        %v711 = vunpack.c.l.b16 %v403
        %v712 = vunpack.c.l.b16 %v404
        %v713 = vunpack.c.l.b16 %v405
        %v714 = vunpack.c.l.b16 %v406
        %v715 = vunpack.c.l.b16 %v407
        %v716 = vunpack.c.l.b16 %v408
        %v717 = vunpack.c.l.b16 %v409
        %v718 = vpack.c.b16 %v685, %v684
        %v719 = vpack.c.b16 %v687, %v686
        %v720 = vpack.c.b16 %v689, %v688
        %v721 = vpack.c.b16 %v691, %v690
        %v722 = vpack.c.b16 %v693, %v692
        %v723 = vpack.c.b16 %v695, %v694
        %v724 = vpack.c.b16 %v697, %v696
        %v725 = vpack.c.b16 %v699, %v698
        %v726 = vpack.c.b16 %v701, %v700
        %v727 = vpack.c.b16 %v703, %v702
        %v728 = vpack.c.b16 %v705, %v704
        %v729 = vpack.c.b16 %v707, %v706
        %v730 = vpack.c.b16 %v709, %v708
        %v731 = vpack.c.b16 %v711, %v710
        %v732 = vpack.c.b16 %v713, %v712
        %v733 = vpack.c.b16 %v715, %v714
        %v734 = vpack.c.b16 %v717, %v716
        %vm752 = vcmask 130048
        %v754 = vsel %vm752, %v572, 0
        %v757 = vsel %vm752, %v575, 0
        %v760 = vsel %vm752, %v578, 0
        %v763 = vsel %vm752, %v581, 0
        %v766 = vsel %vm752, %v584, 0
        %v769 = vsel %vm752, %v587, 0
        %v772 = vsel %vm752, %v590, 0
        %v775 = vsel %vm752, %v593, 0
        %v778 = vsel %vm752, %v596, 0
        %v781 = vsel %vm752, %v599, 0
        %v784 = vsel %vm752, %v602, 0
        %v787 = vsel %vm752, %v605, 0
        %v790 = vsel %vm752, %v608, 0
        %v793 = vsel %vm752, %v611, 0
        %v796 = vsel %vm752, %v614, 0
        %v799 = vsel %vm752, %v617, 0
        %801 = vmatpush.bf16.msra.mxu0 %v725
        %802 = vmatpush.bf16.msra.mxu0 %v724
        %803 = vmatpush.bf16.msra.mxu0 %v723
        %804 = vmatpush.bf16.msra.mxu0 %v722
        %805 = vmatpush.bf16.msra.mxu0 %v721
        %806 = vmatpush.bf16.msra.mxu0 %v720
        %807 = vmatpush.bf16.msra.mxu0 %v719
        %808 = vmatpush.bf16.msra.mxu0 %v718
        %809 = vmatmul.bf16.gmra.mxu0 %v570
        %v810 = vpop.f32.mrf.mxu0
        %v811 = vadd.f32 0.0, %v810
        %v812 = vpop.f32.mrf.mxu0
        %v813 = vadd.f32 0.0, %v812
        %814 = vmatmul.bf16.gmra.mxu0 %v573
        %v815 = vpop.f32.mrf.mxu0
        %v816 = vadd.f32 0.0, %v815
        %v817 = vpop.f32.mrf.mxu0
        %v818 = vadd.f32 0.0, %v817
        %819 = vmatmul.bf16.gmra.mxu0 %v576
        %v820 = vpop.f32.mrf.mxu0
        %v821 = vadd.f32 0.0, %v820
        %v822 = vpop.f32.mrf.mxu0
        %v823 = vadd.f32 0.0, %v822
        %824 = vmatmul.bf16.gmra.mxu0 %v579
        %v825 = vpop.f32.mrf.mxu0
        %v826 = vadd.f32 0.0, %v825
        %v827 = vpop.f32.mrf.mxu0
        %v828 = vadd.f32 0.0, %v827
        %829 = vmatmul.bf16.gmra.mxu0 %v582
        %v830 = vpop.f32.mrf.mxu0
        %v831 = vadd.f32 0.0, %v830
        %v832 = vpop.f32.mrf.mxu0
        %v833 = vadd.f32 0.0, %v832
        %834 = vmatmul.bf16.gmra.mxu0 %v585
        %v835 = vpop.f32.mrf.mxu0
        %v836 = vadd.f32 0.0, %v835
        %v837 = vpop.f32.mrf.mxu0
        %v838 = vadd.f32 0.0, %v837
        %839 = vmatmul.bf16.gmra.mxu0 %v588
        %v840 = vpop.f32.mrf.mxu0
        %v841 = vadd.f32 0.0, %v840
        %v842 = vpop.f32.mrf.mxu0
        %v843 = vadd.f32 0.0, %v842
        %844 = vmatmul.bf16.gmra.mxu0 %v591
        %v845 = vpop.f32.mrf.mxu0
        %v846 = vadd.f32 0.0, %v845
        %v847 = vpop.f32.mrf.mxu0
        %v848 = vadd.f32 0.0, %v847
        %849 = vmatmul.bf16.gmra.mxu0 %v594
        %v850 = vpop.f32.mrf.mxu0
        %v851 = vadd.f32 0.0, %v850
        %v852 = vpop.f32.mrf.mxu0
        %v853 = vadd.f32 0.0, %v852
        %854 = vmatmul.bf16.gmra.mxu0 %v597
        %v855 = vpop.f32.mrf.mxu0
        %v856 = vadd.f32 0.0, %v855
        %v857 = vpop.f32.mrf.mxu0
        %v858 = vadd.f32 0.0, %v857
        %859 = vmatmul.bf16.gmra.mxu0 %v600
        %v860 = vpop.f32.mrf.mxu0
        %v861 = vadd.f32 0.0, %v860
        %v862 = vpop.f32.mrf.mxu0
        %v863 = vadd.f32 0.0, %v862
        %864 = vmatmul.bf16.gmra.mxu0 %v603
        %v865 = vpop.f32.mrf.mxu0
        %v866 = vadd.f32 0.0, %v865
        %v867 = vpop.f32.mrf.mxu0
        %v868 = vadd.f32 0.0, %v867
        %869 = vmatmul.bf16.gmra.mxu0 %v606
        %v870 = vpop.f32.mrf.mxu0
        %v871 = vadd.f32 0.0, %v870
        %v872 = vpop.f32.mrf.mxu0
        %v873 = vadd.f32 0.0, %v872
        %874 = vmatmul.bf16.gmra.mxu0 %v609
        %v875 = vpop.f32.mrf.mxu0
        %v876 = vadd.f32 0.0, %v875
        %v877 = vpop.f32.mrf.mxu0
        %v878 = vadd.f32 0.0, %v877
        %879 = vmatmul.bf16.gmra.mxu0 %v612
        %v880 = vpop.f32.mrf.mxu0
        %v881 = vadd.f32 0.0, %v880
        %v882 = vpop.f32.mrf.mxu0
        %v883 = vadd.f32 0.0, %v882
        %884 = vmatmul.bf16.gmra.mxu0 %v615
        %v885 = vpop.f32.mrf.mxu0
        %v886 = vadd.f32 0.0, %v885
        %v887 = vpop.f32.mrf.mxu0
        %v888 = vadd.f32 0.0, %v887
        %889 = vdwg.mxu0
        %890 = vmatpush.bf16.msra.mxu0 %v733
        %891 = vmatpush.bf16.msra.mxu0 %v732
        %892 = vmatpush.bf16.msra.mxu0 %v731
        %893 = vmatpush.bf16.msra.mxu0 %v730
        %894 = vmatpush.bf16.msra.mxu0 %v729
        %895 = vmatpush.bf16.msra.mxu0 %v728
        %896 = vmatpush.bf16.msra.mxu0 %v727
        %897 = vmatpush.bf16.msra.mxu0 %v726
        %898 = vmatmul.bf16.gmra.mxu0 %v571
        %v899 = vpop.f32.mrf.mxu0
        %v900 = vadd.f32 %v811, %v899
        %v901 = vpop.f32.mrf.mxu0
        %v902 = vadd.f32 %v813, %v901
        %903 = vmatmul.bf16.gmra.mxu0 %v574
        %v904 = vpop.f32.mrf.mxu0
        %v905 = vadd.f32 %v816, %v904
        %v906 = vpop.f32.mrf.mxu0
        %v907 = vadd.f32 %v818, %v906
        %908 = vmatmul.bf16.gmra.mxu0 %v577
        %v909 = vpop.f32.mrf.mxu0
        %v910 = vadd.f32 %v821, %v909
        %v911 = vpop.f32.mrf.mxu0
        %v912 = vadd.f32 %v823, %v911
        %913 = vmatmul.bf16.gmra.mxu0 %v580
        %v914 = vpop.f32.mrf.mxu0
        %v915 = vadd.f32 %v826, %v914
        %v916 = vpop.f32.mrf.mxu0
        %v917 = vadd.f32 %v828, %v916
        %918 = vmatmul.bf16.gmra.mxu0 %v583
        %v919 = vpop.f32.mrf.mxu0
        %v920 = vadd.f32 %v831, %v919
        %v921 = vpop.f32.mrf.mxu0
        %v922 = vadd.f32 %v833, %v921
        %923 = vmatmul.bf16.gmra.mxu0 %v586
        %v924 = vpop.f32.mrf.mxu0
        %v925 = vadd.f32 %v836, %v924
        %v926 = vpop.f32.mrf.mxu0
        %v927 = vadd.f32 %v838, %v926
        %928 = vmatmul.bf16.gmra.mxu0 %v589
        %v929 = vpop.f32.mrf.mxu0
        %v930 = vadd.f32 %v841, %v929
        %v931 = vpop.f32.mrf.mxu0
        %v932 = vadd.f32 %v843, %v931
        %933 = vmatmul.bf16.gmra.mxu0 %v592
        %v934 = vpop.f32.mrf.mxu0
        %v935 = vadd.f32 %v846, %v934
        %v936 = vpop.f32.mrf.mxu0
        %v937 = vadd.f32 %v848, %v936
        %938 = vmatmul.bf16.gmra.mxu0 %v595
        %v939 = vpop.f32.mrf.mxu0
        %v940 = vadd.f32 %v851, %v939
        %v941 = vpop.f32.mrf.mxu0
        %v942 = vadd.f32 %v853, %v941
        %943 = vmatmul.bf16.gmra.mxu0 %v598
        %v944 = vpop.f32.mrf.mxu0
        %v945 = vadd.f32 %v856, %v944
        %v946 = vpop.f32.mrf.mxu0
        %v947 = vadd.f32 %v858, %v946
        %948 = vmatmul.bf16.gmra.mxu0 %v601
        %v949 = vpop.f32.mrf.mxu0
        %v950 = vadd.f32 %v861, %v949
        %v951 = vpop.f32.mrf.mxu0
        %v952 = vadd.f32 %v863, %v951
        %953 = vmatmul.bf16.gmra.mxu0 %v604
        %v954 = vpop.f32.mrf.mxu0
        %v955 = vadd.f32 %v866, %v954
        %v956 = vpop.f32.mrf.mxu0
        %v957 = vadd.f32 %v868, %v956
        %958 = vmatmul.bf16.gmra.mxu0 %v607
        %v959 = vpop.f32.mrf.mxu0
        %v960 = vadd.f32 %v871, %v959
        %v961 = vpop.f32.mrf.mxu0
        %v962 = vadd.f32 %v873, %v961
        %963 = vmatmul.bf16.gmra.mxu0 %v610
        %v964 = vpop.f32.mrf.mxu0
        %v965 = vadd.f32 %v876, %v964
        %v966 = vpop.f32.mrf.mxu0
        %v967 = vadd.f32 %v878, %v966
        %968 = vmatmul.bf16.gmra.mxu0 %v613
        %v969 = vpop.f32.mrf.mxu0
        %v970 = vadd.f32 %v881, %v969
        %v971 = vpop.f32.mrf.mxu0
        %v972 = vadd.f32 %v883, %v971
        %973 = vmatmul.bf16.gmra.mxu0 %v616
        %v974 = vpop.f32.mrf.mxu0
        %v975 = vadd.f32 %v886, %v974
        %v976 = vpop.f32.mrf.mxu0
        %v977 = vadd.f32 %v888, %v976
        %978 = vdwg.mxu0
        %979 = vmatpush.bf16.msra.mxu0 0
        %980 = vmatpush.bf16.msra.mxu0 0
        %981 = vmatpush.bf16.msra.mxu0 0
        %982 = vmatpush.bf16.msra.mxu0 0
        %983 = vmatpush.bf16.msra.mxu0 0
        %984 = vmatpush.bf16.msra.mxu0 0
        %985 = vmatpush.bf16.msra.mxu0 0
        %986 = vmatpush.bf16.msra.mxu0 %v734
        %987 = vmatmul.bf16.gmra.mxu0 %v754
        %v988 = vpop.f32.mrf.mxu0
        %v989 = vadd.f32 %v900, %v988
        %v990 = vpop.f32.mrf.mxu0
        %v991 = vadd.f32 %v902, %v990
        %992 = vmatmul.bf16.gmra.mxu0 %v757
        %v993 = vpop.f32.mrf.mxu0
        %v994 = vadd.f32 %v905, %v993
        %v995 = vpop.f32.mrf.mxu0
        %v996 = vadd.f32 %v907, %v995
        %997 = vmatmul.bf16.gmra.mxu0 %v760
        %v998 = vpop.f32.mrf.mxu0
        %v999 = vadd.f32 %v910, %v998
        %v1000 = vpop.f32.mrf.mxu0
        %v1001 = vadd.f32 %v912, %v1000
        %1002 = vmatmul.bf16.gmra.mxu0 %v763
        %v1003 = vpop.f32.mrf.mxu0
        %v1004 = vadd.f32 %v915, %v1003
        %v1005 = vpop.f32.mrf.mxu0
        %v1006 = vadd.f32 %v917, %v1005
        %1007 = vmatmul.bf16.gmra.mxu0 %v766
        %v1008 = vpop.f32.mrf.mxu0
        %v1009 = vadd.f32 %v920, %v1008
        %v1010 = vpop.f32.mrf.mxu0
        %v1011 = vadd.f32 %v922, %v1010
        %1012 = vmatmul.bf16.gmra.mxu0 %v769
        %v1013 = vpop.f32.mrf.mxu0
        %v1014 = vadd.f32 %v925, %v1013
        %v1015 = vpop.f32.mrf.mxu0
        %v1016 = vadd.f32 %v927, %v1015
        %1017 = vmatmul.bf16.gmra.mxu0 %v772
        %v1018 = vpop.f32.mrf.mxu0
        %v1019 = vadd.f32 %v930, %v1018
        %v1020 = vpop.f32.mrf.mxu0
        %v1021 = vadd.f32 %v932, %v1020
        %1022 = vmatmul.bf16.gmra.mxu0 %v775
        %v1023 = vpop.f32.mrf.mxu0
        %v1024 = vadd.f32 %v935, %v1023
        %v1025 = vpop.f32.mrf.mxu0
        %v1026 = vadd.f32 %v937, %v1025
        %1027 = vmatmul.bf16.gmra.mxu0 %v778
        %v1028 = vpop.f32.mrf.mxu0
        %v1029 = vadd.f32 %v940, %v1028
        %v1030 = vpop.f32.mrf.mxu0
        %v1031 = vadd.f32 %v942, %v1030
        %1032 = vmatmul.bf16.gmra.mxu0 %v781
        %v1033 = vpop.f32.mrf.mxu0
        %v1034 = vadd.f32 %v945, %v1033
        %v1035 = vpop.f32.mrf.mxu0
        %v1036 = vadd.f32 %v947, %v1035
        %1037 = vmatmul.bf16.gmra.mxu0 %v784
        %v1038 = vpop.f32.mrf.mxu0
        %v1039 = vadd.f32 %v950, %v1038
        %v1040 = vpop.f32.mrf.mxu0
        %v1041 = vadd.f32 %v952, %v1040
        %1042 = vmatmul.bf16.gmra.mxu0 %v787
        %v1043 = vpop.f32.mrf.mxu0
        %v1044 = vadd.f32 %v955, %v1043
        %v1045 = vpop.f32.mrf.mxu0
        %v1046 = vadd.f32 %v957, %v1045
        %1047 = vmatmul.bf16.gmra.mxu0 %v790
        %v1048 = vpop.f32.mrf.mxu0
        %v1049 = vadd.f32 %v960, %v1048
        %v1050 = vpop.f32.mrf.mxu0
        %v1051 = vadd.f32 %v962, %v1050
        %1052 = vmatmul.bf16.gmra.mxu0 %v793
        %v1053 = vpop.f32.mrf.mxu0
        %v1054 = vadd.f32 %v965, %v1053
        %v1055 = vpop.f32.mrf.mxu0
        %v1056 = vadd.f32 %v967, %v1055
        %1057 = vmatmul.bf16.gmra.mxu0 %v796
        %v1058 = vpop.f32.mrf.mxu0
        %v1059 = vadd.f32 %v970, %v1058
        %v1060 = vpop.f32.mrf.mxu0
        %v1061 = vadd.f32 %v972, %v1060
        %1062 = vmatmul.bf16.gmra.mxu0 %v799
        %v1063 = vpop.f32.mrf.mxu0
        %v1064 = vadd.f32 %v975, %v1063
        %v1065 = vpop.f32.mrf.mxu0
        %v1066 = vadd.f32 %v977, %v1065
        %1067 = vdwg.mxu0
        %vm1068 = vcmask 400384
        %v1069 = vsel %vm1068, %v989, 0.0
        %1070 = vadd.xlane.f32.xlu0 %v1069
        %v1071 = vpop.xlane.xlu0 %1070
        %v1072 = vsel %vm1068, %v991, 0.0
        %1073 = vadd.xlane.f32.xlu0 %v1072
        %v1074 = vpop.xlane.xlu0 %1073
        %v1075 = vsel %vm1068, %v994, 0.0
        %1076 = vadd.xlane.f32.xlu0 %v1075
        %v1077 = vpop.xlane.xlu0 %1076
        %v1078 = vsel %vm1068, %v996, 0.0
        %1079 = vadd.xlane.f32.xlu0 %v1078
        %v1080 = vpop.xlane.xlu0 %1079
        %v1081 = vsel %vm1068, %v999, 0.0
        %1082 = vadd.xlane.f32.xlu0 %v1081
        %v1083 = vpop.xlane.xlu0 %1082
        %v1084 = vsel %vm1068, %v1001, 0.0
        %1085 = vadd.xlane.f32.xlu0 %v1084
        %v1086 = vpop.xlane.xlu0 %1085
        %v1087 = vsel %vm1068, %v1004, 0.0
        %1088 = vadd.xlane.f32.xlu0 %v1087
        %v1089 = vpop.xlane.xlu0 %1088
        %v1090 = vsel %vm1068, %v1006, 0.0
        %1091 = vadd.xlane.f32.xlu0 %v1090
        %v1092 = vpop.xlane.xlu0 %1091
        %v1093 = vsel %vm1068, %v1009, 0.0
        %1094 = vadd.xlane.f32.xlu0 %v1093
        %v1095 = vpop.xlane.xlu0 %1094
        %v1096 = vsel %vm1068, %v1011, 0.0
        %1097 = vadd.xlane.f32.xlu0 %v1096
        %v1098 = vpop.xlane.xlu0 %1097
        %v1099 = vsel %vm1068, %v1014, 0.0
        %1100 = vadd.xlane.f32.xlu0 %v1099
        %v1101 = vpop.xlane.xlu0 %1100
        %v1102 = vsel %vm1068, %v1016, 0.0
        %1103 = vadd.xlane.f32.xlu0 %v1102
        %v1104 = vpop.xlane.xlu0 %1103
        %v1105 = vsel %vm1068, %v1019, 0.0
        %1106 = vadd.xlane.f32.xlu0 %v1105
        %v1107 = vpop.xlane.xlu0 %1106
        %v1108 = vsel %vm1068, %v1021, 0.0
        %1109 = vadd.xlane.f32.xlu0 %v1108
        %v1110 = vpop.xlane.xlu0 %1109
        %v1111 = vsel %vm1068, %v1024, 0.0
        %1112 = vadd.xlane.f32.xlu0 %v1111
        %v1113 = vpop.xlane.xlu0 %1112
        %v1114 = vsel %vm1068, %v1026, 0.0
        %1115 = vadd.xlane.f32.xlu0 %v1114
        %v1116 = vpop.xlane.xlu0 %1115
        %v1117 = vsel %vm1068, %v1029, 0.0
        %1118 = vadd.xlane.f32.xlu0 %v1117
        %v1119 = vpop.xlane.xlu0 %1118
        %v1120 = vsel %vm1068, %v1031, 0.0
        %1121 = vadd.xlane.f32.xlu0 %v1120
        %v1122 = vpop.xlane.xlu0 %1121
        %v1123 = vsel %vm1068, %v1034, 0.0
        %1124 = vadd.xlane.f32.xlu0 %v1123
        %v1125 = vpop.xlane.xlu0 %1124
        %v1126 = vsel %vm1068, %v1036, 0.0
        %1127 = vadd.xlane.f32.xlu0 %v1126
        %v1128 = vpop.xlane.xlu0 %1127
        %v1129 = vsel %vm1068, %v1039, 0.0
        %1130 = vadd.xlane.f32.xlu0 %v1129
        %v1131 = vpop.xlane.xlu0 %1130
        %v1132 = vsel %vm1068, %v1041, 0.0
        %1133 = vadd.xlane.f32.xlu0 %v1132
        %v1134 = vpop.xlane.xlu0 %1133
        %v1135 = vsel %vm1068, %v1044, 0.0
        %1136 = vadd.xlane.f32.xlu0 %v1135
        %v1137 = vpop.xlane.xlu0 %1136
        %v1138 = vsel %vm1068, %v1046, 0.0
        %1139 = vadd.xlane.f32.xlu0 %v1138
        %v1140 = vpop.xlane.xlu0 %1139
        %v1141 = vsel %vm1068, %v1049, 0.0
        %1142 = vadd.xlane.f32.xlu0 %v1141
        %v1143 = vpop.xlane.xlu0 %1142
        %v1144 = vsel %vm1068, %v1051, 0.0
        %1145 = vadd.xlane.f32.xlu0 %v1144
        %v1146 = vpop.xlane.xlu0 %1145
        %v1147 = vsel %vm1068, %v1054, 0.0
        %1148 = vadd.xlane.f32.xlu0 %v1147
        %v1149 = vpop.xlane.xlu0 %1148
        %v1150 = vsel %vm1068, %v1056, 0.0
        %1151 = vadd.xlane.f32.xlu0 %v1150
        %v1152 = vpop.xlane.xlu0 %1151
        %v1153 = vsel %vm1068, %v1059, 0.0
        %1154 = vadd.xlane.f32.xlu0 %v1153
        %v1155 = vpop.xlane.xlu0 %1154
        %v1156 = vsel %vm1068, %v1061, 0.0
        %1157 = vadd.xlane.f32.xlu0 %v1156
        %v1158 = vpop.xlane.xlu0 %1157
        %v1159 = vsel %vm1068, %v1064, 0.0
        %1160 = vadd.xlane.f32.xlu0 %v1159
        %v1161 = vpop.xlane.xlu0 %1160
        %v1162 = vsel %vm1068, %v1066, 0.0
        %1163 = vadd.xlane.f32.xlu0 %v1162
        %v1164 = vpop.xlane.xlu0 %1163
        %v1165 = vmul.f32 %v989, %v989
        %v1166 = vmul.f32 %v991, %v991
        %v1167 = vmul.f32 %v994, %v994
        %v1168 = vmul.f32 %v996, %v996
        %v1169 = vmul.f32 %v999, %v999
        %v1170 = vmul.f32 %v1001, %v1001
        %v1171 = vmul.f32 %v1004, %v1004
        %v1172 = vmul.f32 %v1006, %v1006
        %v1173 = vmul.f32 %v1009, %v1009
        %v1174 = vmul.f32 %v1011, %v1011
        %v1175 = vmul.f32 %v1014, %v1014
        %v1176 = vmul.f32 %v1016, %v1016
        %v1177 = vmul.f32 %v1019, %v1019
        %v1178 = vmul.f32 %v1021, %v1021
        %v1179 = vmul.f32 %v1024, %v1024
        %v1180 = vmul.f32 %v1026, %v1026
        %v1181 = vmul.f32 %v1029, %v1029
        %v1182 = vmul.f32 %v1031, %v1031
        %v1183 = vmul.f32 %v1034, %v1034
        %v1184 = vmul.f32 %v1036, %v1036
        %v1185 = vmul.f32 %v1039, %v1039
        %v1186 = vmul.f32 %v1041, %v1041
        %v1187 = vmul.f32 %v1044, %v1044
        %v1188 = vmul.f32 %v1046, %v1046
        %v1189 = vmul.f32 %v1049, %v1049
        %v1190 = vmul.f32 %v1051, %v1051
        %v1191 = vmul.f32 %v1054, %v1054
        %v1192 = vmul.f32 %v1056, %v1056
        %v1193 = vmul.f32 %v1059, %v1059
        %v1194 = vmul.f32 %v1061, %v1061
        %v1195 = vmul.f32 %v1064, %v1064
        %v1196 = vmul.f32 %v1066, %v1066
        %v1197 = vsel %vm1068, %v1165, 0.0
        %1198 = vadd.xlane.f32.xlu0 %v1197
        %v1199 = vpop.xlane.xlu0 %1198
        %v1200 = vsel %vm1068, %v1166, 0.0
        %1201 = vadd.xlane.f32.xlu0 %v1200
        %v1202 = vpop.xlane.xlu0 %1201
        %v1203 = vsel %vm1068, %v1167, 0.0
        %1204 = vadd.xlane.f32.xlu0 %v1203
        %v1205 = vpop.xlane.xlu0 %1204
        %v1206 = vsel %vm1068, %v1168, 0.0
        %1207 = vadd.xlane.f32.xlu0 %v1206
        %v1208 = vpop.xlane.xlu0 %1207
        %v1209 = vsel %vm1068, %v1169, 0.0
        %1210 = vadd.xlane.f32.xlu0 %v1209
        %v1211 = vpop.xlane.xlu0 %1210
        %v1212 = vsel %vm1068, %v1170, 0.0
        %1213 = vadd.xlane.f32.xlu0 %v1212
        %v1214 = vpop.xlane.xlu0 %1213
        %v1215 = vsel %vm1068, %v1171, 0.0
        %1216 = vadd.xlane.f32.xlu0 %v1215
        %v1217 = vpop.xlane.xlu0 %1216
        %v1218 = vsel %vm1068, %v1172, 0.0
        %1219 = vadd.xlane.f32.xlu0 %v1218
        %v1220 = vpop.xlane.xlu0 %1219
        %v1221 = vsel %vm1068, %v1173, 0.0
        %1222 = vadd.xlane.f32.xlu0 %v1221
        %v1223 = vpop.xlane.xlu0 %1222
        %v1224 = vsel %vm1068, %v1174, 0.0
        %1225 = vadd.xlane.f32.xlu0 %v1224
        %v1226 = vpop.xlane.xlu0 %1225
        %v1227 = vsel %vm1068, %v1175, 0.0
        %1228 = vadd.xlane.f32.xlu0 %v1227
        %v1229 = vpop.xlane.xlu0 %1228
        %v1230 = vsel %vm1068, %v1176, 0.0
        %1231 = vadd.xlane.f32.xlu0 %v1230
        %v1232 = vpop.xlane.xlu0 %1231
        %v1233 = vsel %vm1068, %v1177, 0.0
        %1234 = vadd.xlane.f32.xlu0 %v1233
        %v1235 = vpop.xlane.xlu0 %1234
        %v1236 = vsel %vm1068, %v1178, 0.0
        %1237 = vadd.xlane.f32.xlu0 %v1236
        %v1238 = vpop.xlane.xlu0 %1237
        %v1239 = vsel %vm1068, %v1179, 0.0
        %1240 = vadd.xlane.f32.xlu0 %v1239
        %v1241 = vpop.xlane.xlu0 %1240
        %v1242 = vsel %vm1068, %v1180, 0.0
        %1243 = vadd.xlane.f32.xlu0 %v1242
        %v1244 = vpop.xlane.xlu0 %1243
        %v1245 = vsel %vm1068, %v1181, 0.0
        %1246 = vadd.xlane.f32.xlu0 %v1245
        %v1247 = vpop.xlane.xlu0 %1246
        %v1248 = vsel %vm1068, %v1182, 0.0
        %1249 = vadd.xlane.f32.xlu0 %v1248
        %v1250 = vpop.xlane.xlu0 %1249
        %v1251 = vsel %vm1068, %v1183, 0.0
        %1252 = vadd.xlane.f32.xlu0 %v1251
        %v1253 = vpop.xlane.xlu0 %1252
        %v1254 = vsel %vm1068, %v1184, 0.0
        %1255 = vadd.xlane.f32.xlu0 %v1254
        %v1256 = vpop.xlane.xlu0 %1255
        %v1257 = vsel %vm1068, %v1185, 0.0
        %1258 = vadd.xlane.f32.xlu0 %v1257
        %v1259 = vpop.xlane.xlu0 %1258
        %v1260 = vsel %vm1068, %v1186, 0.0
        %1261 = vadd.xlane.f32.xlu0 %v1260
        %v1262 = vpop.xlane.xlu0 %1261
        %v1263 = vsel %vm1068, %v1187, 0.0
        %1264 = vadd.xlane.f32.xlu0 %v1263
        %v1265 = vpop.xlane.xlu0 %1264
        %v1266 = vsel %vm1068, %v1188, 0.0
        %1267 = vadd.xlane.f32.xlu0 %v1266
        %v1268 = vpop.xlane.xlu0 %1267
        %v1269 = vsel %vm1068, %v1189, 0.0
        %1270 = vadd.xlane.f32.xlu0 %v1269
        %v1271 = vpop.xlane.xlu0 %1270
        %v1272 = vsel %vm1068, %v1190, 0.0
        %1273 = vadd.xlane.f32.xlu0 %v1272
        %v1274 = vpop.xlane.xlu0 %1273
        %v1275 = vsel %vm1068, %v1191, 0.0
        %1276 = vadd.xlane.f32.xlu0 %v1275
        %v1277 = vpop.xlane.xlu0 %1276
        %v1278 = vsel %vm1068, %v1192, 0.0
        %1279 = vadd.xlane.f32.xlu0 %v1278
        %v1280 = vpop.xlane.xlu0 %1279
        %v1281 = vsel %vm1068, %v1193, 0.0
        %1282 = vadd.xlane.f32.xlu0 %v1281
        %v1283 = vpop.xlane.xlu0 %1282
        %v1284 = vsel %vm1068, %v1194, 0.0
        %1285 = vadd.xlane.f32.xlu0 %v1284
        %v1286 = vpop.xlane.xlu0 %1285
        %v1287 = vsel %vm1068, %v1195, 0.0
        %1288 = vadd.xlane.f32.xlu0 %v1287
        %v1289 = vpop.xlane.xlu0 %1288
        %v1290 = vsel %vm1068, %v1196, 0.0
        %1291 = vadd.xlane.f32.xlu0 %v1290
        %v1292 = vpop.xlane.xlu0 %1291
        %v1293 = vmul.f32 %v1071, 0.020408163
        %v1294 = vmul.f32 %v1074, 0.020408163
        %v1295 = vmul.f32 %v1077, 0.020408163
        %v1296 = vmul.f32 %v1080, 0.020408163
        %v1297 = vmul.f32 %v1083, 0.020408163
        %v1298 = vmul.f32 %v1086, 0.020408163
        %v1299 = vmul.f32 %v1089, 0.020408163
        %v1300 = vmul.f32 %v1092, 0.020408163
        %v1301 = vmul.f32 %v1095, 0.020408163
        %v1302 = vmul.f32 %v1098, 0.020408163
        %v1303 = vmul.f32 %v1101, 0.020408163
        %v1304 = vmul.f32 %v1104, 0.020408163
        %v1305 = vmul.f32 %v1107, 0.020408163
        %v1306 = vmul.f32 %v1110, 0.020408163
        %v1307 = vmul.f32 %v1113, 0.020408163
        %v1308 = vmul.f32 %v1116, 0.020408163
        %v1309 = vmul.f32 %v1119, 0.020408163
        %v1310 = vmul.f32 %v1122, 0.020408163
        %v1311 = vmul.f32 %v1125, 0.020408163
        %v1312 = vmul.f32 %v1128, 0.020408163
        %v1313 = vmul.f32 %v1131, 0.020408163
        %v1314 = vmul.f32 %v1134, 0.020408163
        %v1315 = vmul.f32 %v1137, 0.020408163
        %v1316 = vmul.f32 %v1140, 0.020408163
        %v1317 = vmul.f32 %v1143, 0.020408163
        %v1318 = vmul.f32 %v1146, 0.020408163
        %v1319 = vmul.f32 %v1149, 0.020408163
        %v1320 = vmul.f32 %v1152, 0.020408163
        %v1321 = vmul.f32 %v1155, 0.020408163
        %v1322 = vmul.f32 %v1158, 0.020408163
        %v1323 = vmul.f32 %v1161, 0.020408163
        %v1324 = vmul.f32 %v1164, 0.020408163
        %v1325 = vmul.f32 %v1199, 0.020408163
        %v1326 = vmul.f32 %v1202, 0.020408163
        %v1327 = vmul.f32 %v1205, 0.020408163
        %v1328 = vmul.f32 %v1208, 0.020408163
        %v1329 = vmul.f32 %v1211, 0.020408163
        %v1330 = vmul.f32 %v1214, 0.020408163
        %v1331 = vmul.f32 %v1217, 0.020408163
        %v1332 = vmul.f32 %v1220, 0.020408163
        %v1333 = vmul.f32 %v1223, 0.020408163
        %v1334 = vmul.f32 %v1226, 0.020408163
        %v1335 = vmul.f32 %v1229, 0.020408163
        %v1336 = vmul.f32 %v1232, 0.020408163
        %v1337 = vmul.f32 %v1235, 0.020408163
        %v1338 = vmul.f32 %v1238, 0.020408163
        %v1339 = vmul.f32 %v1241, 0.020408163
        %v1340 = vmul.f32 %v1244, 0.020408163
        %v1341 = vmul.f32 %v1247, 0.020408163
        %v1342 = vmul.f32 %v1250, 0.020408163
        %v1343 = vmul.f32 %v1253, 0.020408163
        %v1344 = vmul.f32 %v1256, 0.020408163
        %v1345 = vmul.f32 %v1259, 0.020408163
        %v1346 = vmul.f32 %v1262, 0.020408163
        %v1347 = vmul.f32 %v1265, 0.020408163
        %v1348 = vmul.f32 %v1268, 0.020408163
        %v1349 = vmul.f32 %v1271, 0.020408163
        %v1350 = vmul.f32 %v1274, 0.020408163
        %v1351 = vmul.f32 %v1277, 0.020408163
        %v1352 = vmul.f32 %v1280, 0.020408163
        %v1353 = vmul.f32 %v1283, 0.020408163
        %v1354 = vmul.f32 %v1286, 0.020408163
        %v1355 = vmul.f32 %v1289, 0.020408163
        %v1356 = vmul.f32 %v1292, 0.020408163
        %v1357 = vmul.f32 %v1293, %v1293
        %v1358 = vmul.f32 %v1294, %v1294
        %v1359 = vmul.f32 %v1295, %v1295
        %v1360 = vmul.f32 %v1296, %v1296
        %v1361 = vmul.f32 %v1297, %v1297
        %v1362 = vmul.f32 %v1298, %v1298
        %v1363 = vmul.f32 %v1299, %v1299
        %v1364 = vmul.f32 %v1300, %v1300
        %v1365 = vmul.f32 %v1301, %v1301
        %v1366 = vmul.f32 %v1302, %v1302
        %v1367 = vmul.f32 %v1303, %v1303
        %v1368 = vmul.f32 %v1304, %v1304
        %v1369 = vmul.f32 %v1305, %v1305
        %v1370 = vmul.f32 %v1306, %v1306
        %v1371 = vmul.f32 %v1307, %v1307
        %v1372 = vmul.f32 %v1308, %v1308
        %v1373 = vmul.f32 %v1309, %v1309
        %v1374 = vmul.f32 %v1310, %v1310
        %v1375 = vmul.f32 %v1311, %v1311
        %v1376 = vmul.f32 %v1312, %v1312
        %v1377 = vmul.f32 %v1313, %v1313
        %v1378 = vmul.f32 %v1314, %v1314
        %v1379 = vmul.f32 %v1315, %v1315
        %v1380 = vmul.f32 %v1316, %v1316
        %v1381 = vmul.f32 %v1317, %v1317
        %v1382 = vmul.f32 %v1318, %v1318
        %v1383 = vmul.f32 %v1319, %v1319
        %v1384 = vmul.f32 %v1320, %v1320
        %v1385 = vmul.f32 %v1321, %v1321
        %v1386 = vmul.f32 %v1322, %v1322
        %v1387 = vmul.f32 %v1323, %v1323
        %v1388 = vmul.f32 %v1324, %v1324
        %v1389 = vsub.f32 %v1325, %v1357
        %v1390 = vsub.f32 %v1326, %v1358
        %v1391 = vsub.f32 %v1327, %v1359
        %v1392 = vsub.f32 %v1328, %v1360
        %v1393 = vsub.f32 %v1329, %v1361
        %v1394 = vsub.f32 %v1330, %v1362
        %v1395 = vsub.f32 %v1331, %v1363
        %v1396 = vsub.f32 %v1332, %v1364
        %v1397 = vsub.f32 %v1333, %v1365
        %v1398 = vsub.f32 %v1334, %v1366
        %v1399 = vsub.f32 %v1335, %v1367
        %v1400 = vsub.f32 %v1336, %v1368
        %v1401 = vsub.f32 %v1337, %v1369
        %v1402 = vsub.f32 %v1338, %v1370
        %v1403 = vsub.f32 %v1339, %v1371
        %v1404 = vsub.f32 %v1340, %v1372
        %v1405 = vsub.f32 %v1341, %v1373
        %v1406 = vsub.f32 %v1342, %v1374
        %v1407 = vsub.f32 %v1343, %v1375
        %v1408 = vsub.f32 %v1344, %v1376
        %v1409 = vsub.f32 %v1345, %v1377
        %v1410 = vsub.f32 %v1346, %v1378
        %v1411 = vsub.f32 %v1347, %v1379
        %v1412 = vsub.f32 %v1348, %v1380
        %v1413 = vsub.f32 %v1349, %v1381
        %v1414 = vsub.f32 %v1350, %v1382
        %v1415 = vsub.f32 %v1351, %v1383
        %v1416 = vsub.f32 %v1352, %v1384
        %v1417 = vsub.f32 %v1353, %v1385
        %v1418 = vsub.f32 %v1354, %v1386
        %v1419 = vsub.f32 %v1355, %v1387
        %v1420 = vsub.f32 %v1356, %v1388
        %v1421 = vmax.f32 %v1389, 0.0
        %v1422 = vmax.f32 %v1390, 0.0
        %v1423 = vmax.f32 %v1391, 0.0
        %v1424 = vmax.f32 %v1392, 0.0
        %v1425 = vmax.f32 %v1393, 0.0
        %v1426 = vmax.f32 %v1394, 0.0
        %v1427 = vmax.f32 %v1395, 0.0
        %v1428 = vmax.f32 %v1396, 0.0
        %v1429 = vmax.f32 %v1397, 0.0
        %v1430 = vmax.f32 %v1398, 0.0
        %v1431 = vmax.f32 %v1399, 0.0
        %v1432 = vmax.f32 %v1400, 0.0
        %v1433 = vmax.f32 %v1401, 0.0
        %v1434 = vmax.f32 %v1402, 0.0
        %v1435 = vmax.f32 %v1403, 0.0
        %v1436 = vmax.f32 %v1404, 0.0
        %v1437 = vmax.f32 %v1405, 0.0
        %v1438 = vmax.f32 %v1406, 0.0
        %v1439 = vmax.f32 %v1407, 0.0
        %v1440 = vmax.f32 %v1408, 0.0
        %v1441 = vmax.f32 %v1409, 0.0
        %v1442 = vmax.f32 %v1410, 0.0
        %v1443 = vmax.f32 %v1411, 0.0
        %v1444 = vmax.f32 %v1412, 0.0
        %v1445 = vmax.f32 %v1413, 0.0
        %v1446 = vmax.f32 %v1414, 0.0
        %v1447 = vmax.f32 %v1415, 0.0
        %v1448 = vmax.f32 %v1416, 0.0
        %v1449 = vmax.f32 %v1417, 0.0
        %v1450 = vmax.f32 %v1418, 0.0
        %v1451 = vmax.f32 %v1419, 0.0
        %v1452 = vmax.f32 %v1420, 0.0
        %v1453 = vadd.f32 %v1421, 1e-05
        %v1454 = vadd.f32 %v1422, 1e-05
        %v1455 = vadd.f32 %v1423, 1e-05
        %v1456 = vadd.f32 %v1424, 1e-05
        %v1457 = vadd.f32 %v1425, 1e-05
        %v1458 = vadd.f32 %v1426, 1e-05
        %v1459 = vadd.f32 %v1427, 1e-05
        %v1460 = vadd.f32 %v1428, 1e-05
        %v1461 = vadd.f32 %v1429, 1e-05
        %v1462 = vadd.f32 %v1430, 1e-05
        %v1463 = vadd.f32 %v1431, 1e-05
        %v1464 = vadd.f32 %v1432, 1e-05
        %v1465 = vadd.f32 %v1433, 1e-05
        %v1466 = vadd.f32 %v1434, 1e-05
        %v1467 = vadd.f32 %v1435, 1e-05
        %v1468 = vadd.f32 %v1436, 1e-05
        %v1469 = vadd.f32 %v1437, 1e-05
        %v1470 = vadd.f32 %v1438, 1e-05
        %v1471 = vadd.f32 %v1439, 1e-05
        %v1472 = vadd.f32 %v1440, 1e-05
        %v1473 = vadd.f32 %v1441, 1e-05
        %v1474 = vadd.f32 %v1442, 1e-05
        %v1475 = vadd.f32 %v1443, 1e-05
        %v1476 = vadd.f32 %v1444, 1e-05
        %v1477 = vadd.f32 %v1445, 1e-05
        %v1478 = vadd.f32 %v1446, 1e-05
        %v1479 = vadd.f32 %v1447, 1e-05
        %v1480 = vadd.f32 %v1448, 1e-05
        %v1481 = vadd.f32 %v1449, 1e-05
        %v1482 = vadd.f32 %v1450, 1e-05
        %v1483 = vadd.f32 %v1451, 1e-05
        %v1484 = vadd.f32 %v1452, 1e-05
        %v1485 = vrsqrt.pop %v1453
        %v1486 = vmul.f32 %v1485, %v1453
        %v1487 = vmul.f32 %v1486, %v1485
        %v1488 = vmul.f32 0.5, %v1487
        %v1489 = vsub.f32 1.5, %v1488
        %v1490 = vmul.f32 %v1485, %v1489
        %vm1491 = vweird.f32 %v1453
        %vm1492 = vweird.f32 %v1485
        %vm1493 = vmor %vm1491, %vm1492
        %v1494 = vsel %vm1493, %v1485, %v1490
        %v1495 = vrsqrt.pop %v1454
        %v1496 = vmul.f32 %v1495, %v1454
        %v1497 = vmul.f32 %v1496, %v1495
        %v1498 = vmul.f32 0.5, %v1497
        %v1499 = vsub.f32 1.5, %v1498
        %v1500 = vmul.f32 %v1495, %v1499
        %vm1501 = vweird.f32 %v1454
        %vm1502 = vweird.f32 %v1495
        %vm1503 = vmor %vm1501, %vm1502
        %v1504 = vsel %vm1503, %v1495, %v1500
        %v1505 = vrsqrt.pop %v1455
        %v1506 = vmul.f32 %v1505, %v1455
        %v1507 = vmul.f32 %v1506, %v1505
        %v1508 = vmul.f32 0.5, %v1507
        %v1509 = vsub.f32 1.5, %v1508
        %v1510 = vmul.f32 %v1505, %v1509
        %vm1511 = vweird.f32 %v1455
        %vm1512 = vweird.f32 %v1505
        %vm1513 = vmor %vm1511, %vm1512
        %v1514 = vsel %vm1513, %v1505, %v1510
        %v1515 = vrsqrt.pop %v1456
        %v1516 = vmul.f32 %v1515, %v1456
        %v1517 = vmul.f32 %v1516, %v1515
        %v1518 = vmul.f32 0.5, %v1517
        %v1519 = vsub.f32 1.5, %v1518
        %v1520 = vmul.f32 %v1515, %v1519
        %vm1521 = vweird.f32 %v1456
        %vm1522 = vweird.f32 %v1515
        %vm1523 = vmor %vm1521, %vm1522
        %v1524 = vsel %vm1523, %v1515, %v1520
        %v1525 = vrsqrt.pop %v1457
        %v1526 = vmul.f32 %v1525, %v1457
        %v1527 = vmul.f32 %v1526, %v1525
        %v1528 = vmul.f32 0.5, %v1527
        %v1529 = vsub.f32 1.5, %v1528
        %v1530 = vmul.f32 %v1525, %v1529
        %vm1531 = vweird.f32 %v1457
        %vm1532 = vweird.f32 %v1525
        %vm1533 = vmor %vm1531, %vm1532
        %v1534 = vsel %vm1533, %v1525, %v1530
        %v1535 = vrsqrt.pop %v1458
        %v1536 = vmul.f32 %v1535, %v1458
        %v1537 = vmul.f32 %v1536, %v1535
        %v1538 = vmul.f32 0.5, %v1537
        %v1539 = vsub.f32 1.5, %v1538
        %v1540 = vmul.f32 %v1535, %v1539
        %vm1541 = vweird.f32 %v1458
        %vm1542 = vweird.f32 %v1535
        %vm1543 = vmor %vm1541, %vm1542
        %v1544 = vsel %vm1543, %v1535, %v1540
        %v1545 = vrsqrt.pop %v1459
        %v1546 = vmul.f32 %v1545, %v1459
        %v1547 = vmul.f32 %v1546, %v1545
        %v1548 = vmul.f32 0.5, %v1547
        %v1549 = vsub.f32 1.5, %v1548
        %v1550 = vmul.f32 %v1545, %v1549
        %vm1551 = vweird.f32 %v1459
        %vm1552 = vweird.f32 %v1545
        %vm1553 = vmor %vm1551, %vm1552
        %v1554 = vsel %vm1553, %v1545, %v1550
        %v1555 = vrsqrt.pop %v1460
        %v1556 = vmul.f32 %v1555, %v1460
        %v1557 = vmul.f32 %v1556, %v1555
        %v1558 = vmul.f32 0.5, %v1557
        %v1559 = vsub.f32 1.5, %v1558
        %v1560 = vmul.f32 %v1555, %v1559
        %vm1561 = vweird.f32 %v1460
        %vm1562 = vweird.f32 %v1555
        %vm1563 = vmor %vm1561, %vm1562
        %v1564 = vsel %vm1563, %v1555, %v1560
        %v1565 = vrsqrt.pop %v1461
        %v1566 = vmul.f32 %v1565, %v1461
        %v1567 = vmul.f32 %v1566, %v1565
        %v1568 = vmul.f32 0.5, %v1567
        %v1569 = vsub.f32 1.5, %v1568
        %v1570 = vmul.f32 %v1565, %v1569
        %vm1571 = vweird.f32 %v1461
        %vm1572 = vweird.f32 %v1565
        %vm1573 = vmor %vm1571, %vm1572
        %v1574 = vsel %vm1573, %v1565, %v1570
        %v1575 = vrsqrt.pop %v1462
        %v1576 = vmul.f32 %v1575, %v1462
        %v1577 = vmul.f32 %v1576, %v1575
        %v1578 = vmul.f32 0.5, %v1577
        %v1579 = vsub.f32 1.5, %v1578
        %v1580 = vmul.f32 %v1575, %v1579
        %vm1581 = vweird.f32 %v1462
        %vm1582 = vweird.f32 %v1575
        %vm1583 = vmor %vm1581, %vm1582
        %v1584 = vsel %vm1583, %v1575, %v1580
        %v1585 = vrsqrt.pop %v1463
        %v1586 = vmul.f32 %v1585, %v1463
        %v1587 = vmul.f32 %v1586, %v1585
        %v1588 = vmul.f32 0.5, %v1587
        %v1589 = vsub.f32 1.5, %v1588
        %v1590 = vmul.f32 %v1585, %v1589
        %vm1591 = vweird.f32 %v1463
        %vm1592 = vweird.f32 %v1585
        %vm1593 = vmor %vm1591, %vm1592
        %v1594 = vsel %vm1593, %v1585, %v1590
        %v1595 = vrsqrt.pop %v1464
        %v1596 = vmul.f32 %v1595, %v1464
        %v1597 = vmul.f32 %v1596, %v1595
        %v1598 = vmul.f32 0.5, %v1597
        %v1599 = vsub.f32 1.5, %v1598
        %v1600 = vmul.f32 %v1595, %v1599
        %vm1601 = vweird.f32 %v1464
        %vm1602 = vweird.f32 %v1595
        %vm1603 = vmor %vm1601, %vm1602
        %v1604 = vsel %vm1603, %v1595, %v1600
        %v1605 = vrsqrt.pop %v1465
        %v1606 = vmul.f32 %v1605, %v1465
        %v1607 = vmul.f32 %v1606, %v1605
        %v1608 = vmul.f32 0.5, %v1607
        %v1609 = vsub.f32 1.5, %v1608
        %v1610 = vmul.f32 %v1605, %v1609
        %vm1611 = vweird.f32 %v1465
        %vm1612 = vweird.f32 %v1605
        %vm1613 = vmor %vm1611, %vm1612
        %v1614 = vsel %vm1613, %v1605, %v1610
        %v1615 = vrsqrt.pop %v1466
        %v1616 = vmul.f32 %v1615, %v1466
        %v1617 = vmul.f32 %v1616, %v1615
        %v1618 = vmul.f32 0.5, %v1617
        %v1619 = vsub.f32 1.5, %v1618
        %v1620 = vmul.f32 %v1615, %v1619
        %vm1621 = vweird.f32 %v1466
        %vm1622 = vweird.f32 %v1615
        %vm1623 = vmor %vm1621, %vm1622
        %v1624 = vsel %vm1623, %v1615, %v1620
        %v1625 = vrsqrt.pop %v1467
        %v1626 = vmul.f32 %v1625, %v1467
        %v1627 = vmul.f32 %v1626, %v1625
        %v1628 = vmul.f32 0.5, %v1627
        %v1629 = vsub.f32 1.5, %v1628
        %v1630 = vmul.f32 %v1625, %v1629
        %vm1631 = vweird.f32 %v1467
        %vm1632 = vweird.f32 %v1625
        %vm1633 = vmor %vm1631, %vm1632
        %v1634 = vsel %vm1633, %v1625, %v1630
        %v1635 = vrsqrt.pop %v1468
        %v1636 = vmul.f32 %v1635, %v1468
        %v1637 = vmul.f32 %v1636, %v1635
        %v1638 = vmul.f32 0.5, %v1637
        %v1639 = vsub.f32 1.5, %v1638
        %v1640 = vmul.f32 %v1635, %v1639
        %vm1641 = vweird.f32 %v1468
        %vm1642 = vweird.f32 %v1635
        %vm1643 = vmor %vm1641, %vm1642
        %v1644 = vsel %vm1643, %v1635, %v1640
        %v1645 = vrsqrt.pop %v1469
        %v1646 = vmul.f32 %v1645, %v1469
        %v1647 = vmul.f32 %v1646, %v1645
        %v1648 = vmul.f32 0.5, %v1647
        %v1649 = vsub.f32 1.5, %v1648
        %v1650 = vmul.f32 %v1645, %v1649
        %vm1651 = vweird.f32 %v1469
        %vm1652 = vweird.f32 %v1645
        %vm1653 = vmor %vm1651, %vm1652
        %v1654 = vsel %vm1653, %v1645, %v1650
        %v1655 = vrsqrt.pop %v1470
        %v1656 = vmul.f32 %v1655, %v1470
        %v1657 = vmul.f32 %v1656, %v1655
        %v1658 = vmul.f32 0.5, %v1657
        %v1659 = vsub.f32 1.5, %v1658
        %v1660 = vmul.f32 %v1655, %v1659
        %vm1661 = vweird.f32 %v1470
        %vm1662 = vweird.f32 %v1655
        %vm1663 = vmor %vm1661, %vm1662
        %v1664 = vsel %vm1663, %v1655, %v1660
        %v1665 = vrsqrt.pop %v1471
        %v1666 = vmul.f32 %v1665, %v1471
        %v1667 = vmul.f32 %v1666, %v1665
        %v1668 = vmul.f32 0.5, %v1667
        %v1669 = vsub.f32 1.5, %v1668
        %v1670 = vmul.f32 %v1665, %v1669
        %vm1671 = vweird.f32 %v1471
        %vm1672 = vweird.f32 %v1665
        %vm1673 = vmor %vm1671, %vm1672
        %v1674 = vsel %vm1673, %v1665, %v1670
        %v1675 = vrsqrt.pop %v1472
        %v1676 = vmul.f32 %v1675, %v1472
        %v1677 = vmul.f32 %v1676, %v1675
        %v1678 = vmul.f32 0.5, %v1677
        %v1679 = vsub.f32 1.5, %v1678
        %v1680 = vmul.f32 %v1675, %v1679
        %vm1681 = vweird.f32 %v1472
        %vm1682 = vweird.f32 %v1675
        %vm1683 = vmor %vm1681, %vm1682
        %v1684 = vsel %vm1683, %v1675, %v1680
        %v1685 = vrsqrt.pop %v1473
        %v1686 = vmul.f32 %v1685, %v1473
        %v1687 = vmul.f32 %v1686, %v1685
        %v1688 = vmul.f32 0.5, %v1687
        %v1689 = vsub.f32 1.5, %v1688
        %v1690 = vmul.f32 %v1685, %v1689
        %vm1691 = vweird.f32 %v1473
        %vm1692 = vweird.f32 %v1685
        %vm1693 = vmor %vm1691, %vm1692
        %v1694 = vsel %vm1693, %v1685, %v1690
        %v1695 = vrsqrt.pop %v1474
        %v1696 = vmul.f32 %v1695, %v1474
        %v1697 = vmul.f32 %v1696, %v1695
        %v1698 = vmul.f32 0.5, %v1697
        %v1699 = vsub.f32 1.5, %v1698
        %v1700 = vmul.f32 %v1695, %v1699
        %vm1701 = vweird.f32 %v1474
        %vm1702 = vweird.f32 %v1695
        %vm1703 = vmor %vm1701, %vm1702
        %v1704 = vsel %vm1703, %v1695, %v1700
        %v1705 = vrsqrt.pop %v1475
        %v1706 = vmul.f32 %v1705, %v1475
        %v1707 = vmul.f32 %v1706, %v1705
        %v1708 = vmul.f32 0.5, %v1707
        %v1709 = vsub.f32 1.5, %v1708
        %v1710 = vmul.f32 %v1705, %v1709
        %vm1711 = vweird.f32 %v1475
        %vm1712 = vweird.f32 %v1705
        %vm1713 = vmor %vm1711, %vm1712
        %v1714 = vsel %vm1713, %v1705, %v1710
        %v1715 = vrsqrt.pop %v1476
        %v1716 = vmul.f32 %v1715, %v1476
        %v1717 = vmul.f32 %v1716, %v1715
        %v1718 = vmul.f32 0.5, %v1717
        %v1719 = vsub.f32 1.5, %v1718
        %v1720 = vmul.f32 %v1715, %v1719
        %vm1721 = vweird.f32 %v1476
        %vm1722 = vweird.f32 %v1715
        %vm1723 = vmor %vm1721, %vm1722
        %v1724 = vsel %vm1723, %v1715, %v1720
        %v1725 = vrsqrt.pop %v1477
        %v1726 = vmul.f32 %v1725, %v1477
        %v1727 = vmul.f32 %v1726, %v1725
        %v1728 = vmul.f32 0.5, %v1727
        %v1729 = vsub.f32 1.5, %v1728
        %v1730 = vmul.f32 %v1725, %v1729
        %vm1731 = vweird.f32 %v1477
        %vm1732 = vweird.f32 %v1725
        %vm1733 = vmor %vm1731, %vm1732
        %v1734 = vsel %vm1733, %v1725, %v1730
        %v1735 = vrsqrt.pop %v1478
        %v1736 = vmul.f32 %v1735, %v1478
        %v1737 = vmul.f32 %v1736, %v1735
        %v1738 = vmul.f32 0.5, %v1737
        %v1739 = vsub.f32 1.5, %v1738
        %v1740 = vmul.f32 %v1735, %v1739
        %vm1741 = vweird.f32 %v1478
        %vm1742 = vweird.f32 %v1735
        %vm1743 = vmor %vm1741, %vm1742
        %v1744 = vsel %vm1743, %v1735, %v1740
        %v1745 = vrsqrt.pop %v1479
        %v1746 = vmul.f32 %v1745, %v1479
        %v1747 = vmul.f32 %v1746, %v1745
        %v1748 = vmul.f32 0.5, %v1747
        %v1749 = vsub.f32 1.5, %v1748
        %v1750 = vmul.f32 %v1745, %v1749
        %vm1751 = vweird.f32 %v1479
        %vm1752 = vweird.f32 %v1745
        %vm1753 = vmor %vm1751, %vm1752
        %v1754 = vsel %vm1753, %v1745, %v1750
        %v1755 = vrsqrt.pop %v1480
        %v1756 = vmul.f32 %v1755, %v1480
        %v1757 = vmul.f32 %v1756, %v1755
        %v1758 = vmul.f32 0.5, %v1757
        %v1759 = vsub.f32 1.5, %v1758
        %v1760 = vmul.f32 %v1755, %v1759
        %vm1761 = vweird.f32 %v1480
        %vm1762 = vweird.f32 %v1755
        %vm1763 = vmor %vm1761, %vm1762
        %v1764 = vsel %vm1763, %v1755, %v1760
        %v1765 = vrsqrt.pop %v1481
        %v1766 = vmul.f32 %v1765, %v1481
        %v1767 = vmul.f32 %v1766, %v1765
        %v1768 = vmul.f32 0.5, %v1767
        %v1769 = vsub.f32 1.5, %v1768
        %v1770 = vmul.f32 %v1765, %v1769
        %vm1771 = vweird.f32 %v1481
        %vm1772 = vweird.f32 %v1765
        %vm1773 = vmor %vm1771, %vm1772
        %v1774 = vsel %vm1773, %v1765, %v1770
        %v1775 = vrsqrt.pop %v1482
        %v1776 = vmul.f32 %v1775, %v1482
        %v1777 = vmul.f32 %v1776, %v1775
        %v1778 = vmul.f32 0.5, %v1777
        %v1779 = vsub.f32 1.5, %v1778
        %v1780 = vmul.f32 %v1775, %v1779
        %vm1781 = vweird.f32 %v1482
        %vm1782 = vweird.f32 %v1775
        %vm1783 = vmor %vm1781, %vm1782
        %v1784 = vsel %vm1783, %v1775, %v1780
        %v1785 = vrsqrt.pop %v1483
        %v1786 = vmul.f32 %v1785, %v1483
        %v1787 = vmul.f32 %v1786, %v1785
        %v1788 = vmul.f32 0.5, %v1787
        %v1789 = vsub.f32 1.5, %v1788
        %v1790 = vmul.f32 %v1785, %v1789
        %vm1791 = vweird.f32 %v1483
        %vm1792 = vweird.f32 %v1785
        %vm1793 = vmor %vm1791, %vm1792
        %v1794 = vsel %vm1793, %v1785, %v1790
        %v1795 = vrsqrt.pop %v1484
        %v1796 = vmul.f32 %v1795, %v1484
        %v1797 = vmul.f32 %v1796, %v1795
        %v1798 = vmul.f32 0.5, %v1797
        %v1799 = vsub.f32 1.5, %v1798
        %v1800 = vmul.f32 %v1795, %v1799
        %vm1801 = vweird.f32 %v1484
        %vm1802 = vweird.f32 %v1795
        %vm1803 = vmor %vm1801, %vm1802
        %v1804 = vsel %vm1803, %v1795, %v1800
        %v1805 = vld [vmem:[%s286] sm:$0xff]
        %v1806 = vld [vmem:[%s286 + $0x8] sm:$0xff]
        %v1807 = vld [vmem:[%s286 + $0x10] sm:$0xff]
        %v1808 = vld [vmem:[%s286 + $0x18] sm:$0xff]
        %v1809 = vld [vmem:[%s286 + $0x20] sm:$0xff]
        %v1810 = vld [vmem:[%s286 + $0x28] sm:$0xff]
        %v1811 = vld [vmem:[%s286 + $0x30] sm:$0xff]
        %v1812 = vld [vmem:[%s286 + $0x38] sm:$0xff]
        %v1813 = vld [vmem:[%s286 + $0x40] sm:$0xff]
        %v1814 = vld [vmem:[%s286 + $0x48] sm:$0xff]
        %v1815 = vld [vmem:[%s286 + $0x50] sm:$0xff]
        %v1816 = vld [vmem:[%s286 + $0x58] sm:$0xff]
        %v1817 = vld [vmem:[%s286 + $0x60] sm:$0xff]
        %v1818 = vld [vmem:[%s286 + $0x68] sm:$0xff]
        %v1819 = vld [vmem:[%s286 + $0x70] sm:$0xff]
        %v1820 = vld [vmem:[%s286 + $0x78] sm:$0xff]
        %v1821 = vld [vmem:[%s286 + $0x80] sm:$0xff]
        %v1822 = vld [vmem:[%s286 + $0x88] sm:$0xff]
        %v1823 = vld [vmem:[%s286 + $0x90] sm:$0xff]
        %v1824 = vld [vmem:[%s286 + $0x98] sm:$0xff]
        %v1825 = vld [vmem:[%s286 + $0xa0] sm:$0xff]
        %v1826 = vld [vmem:[%s286 + $0xa8] sm:$0xff]
        %v1827 = vld [vmem:[%s286 + $0xb0] sm:$0xff]
        %v1828 = vld [vmem:[%s286 + $0xb8] sm:$0xff]
        %v1829 = vld [vmem:[%s286 + $0xc0] sm:$0xff]
        %v1830 = vld [vmem:[%s286 + $0xc8] sm:$0xff]
        %v1831 = vld [vmem:[%s286 + $0xd0] sm:$0xff]
        %v1832 = vld [vmem:[%s286 + $0xd8] sm:$0xff]
        %v1833 = vld [vmem:[%s286 + $0xe0] sm:$0xff]
        %v1834 = vld [vmem:[%s286 + $0xe8] sm:$0xff]
        %v1835 = vld [vmem:[%s286 + $0xf0] sm:$0xff]
        %v1836 = vld [vmem:[%s286 + $0xf8] sm:$0xff]
        %v1837 = vmul.f32 %v1805, %v1494
        %v1838 = vmul.f32 %v1806, %v1504
        %v1839 = vmul.f32 %v1807, %v1514
        %v1840 = vmul.f32 %v1808, %v1524
        %v1841 = vmul.f32 %v1809, %v1534
        %v1842 = vmul.f32 %v1810, %v1544
        %v1843 = vmul.f32 %v1811, %v1554
        %v1844 = vmul.f32 %v1812, %v1564
        %v1845 = vmul.f32 %v1813, %v1574
        %v1846 = vmul.f32 %v1814, %v1584
        %v1847 = vmul.f32 %v1815, %v1594
        %v1848 = vmul.f32 %v1816, %v1604
        %v1849 = vmul.f32 %v1817, %v1614
        %v1850 = vmul.f32 %v1818, %v1624
        %v1851 = vmul.f32 %v1819, %v1634
        %v1852 = vmul.f32 %v1820, %v1644
        %v1853 = vmul.f32 %v1821, %v1654
        %v1854 = vmul.f32 %v1822, %v1664
        %v1855 = vmul.f32 %v1823, %v1674
        %v1856 = vmul.f32 %v1824, %v1684
        %v1857 = vmul.f32 %v1825, %v1694
        %v1858 = vmul.f32 %v1826, %v1704
        %v1859 = vmul.f32 %v1827, %v1714
        %v1860 = vmul.f32 %v1828, %v1724
        %v1861 = vmul.f32 %v1829, %v1734
        %v1862 = vmul.f32 %v1830, %v1744
        %v1863 = vmul.f32 %v1831, %v1754
        %v1864 = vmul.f32 %v1832, %v1764
        %v1865 = vmul.f32 %v1833, %v1774
        %v1866 = vmul.f32 %v1834, %v1784
        %v1867 = vmul.f32 %v1835, %v1794
        %v1868 = vmul.f32 %v1836, %v1804
        %v1869 = vld [vmem:[%s300] sm:$0xff]
        %v1870 = vld [vmem:[%s300 + $0x8] sm:$0xff]
        %v1871 = vld [vmem:[%s300 + $0x10] sm:$0xff]
        %v1872 = vld [vmem:[%s300 + $0x18] sm:$0xff]
        %v1873 = vld [vmem:[%s300 + $0x20] sm:$0xff]
        %v1874 = vld [vmem:[%s300 + $0x28] sm:$0xff]
        %v1875 = vld [vmem:[%s300 + $0x30] sm:$0xff]
        %v1876 = vld [vmem:[%s300 + $0x38] sm:$0xff]
        %v1877 = vld [vmem:[%s300 + $0x40] sm:$0xff]
        %v1878 = vld [vmem:[%s300 + $0x48] sm:$0xff]
        %v1879 = vld [vmem:[%s300 + $0x50] sm:$0xff]
        %v1880 = vld [vmem:[%s300 + $0x58] sm:$0xff]
        %v1881 = vld [vmem:[%s300 + $0x60] sm:$0xff]
        %v1882 = vld [vmem:[%s300 + $0x68] sm:$0xff]
        %v1883 = vld [vmem:[%s300 + $0x70] sm:$0xff]
        %v1884 = vld [vmem:[%s300 + $0x78] sm:$0xff]
        %v1885 = vld [vmem:[%s300 + $0x80] sm:$0xff]
        %v1886 = vld [vmem:[%s300 + $0x88] sm:$0xff]
        %v1887 = vld [vmem:[%s300 + $0x90] sm:$0xff]
        %v1888 = vld [vmem:[%s300 + $0x98] sm:$0xff]
        %v1889 = vld [vmem:[%s300 + $0xa0] sm:$0xff]
        %v1890 = vld [vmem:[%s300 + $0xa8] sm:$0xff]
        %v1891 = vld [vmem:[%s300 + $0xb0] sm:$0xff]
        %v1892 = vld [vmem:[%s300 + $0xb8] sm:$0xff]
        %v1893 = vld [vmem:[%s300 + $0xc0] sm:$0xff]
        %v1894 = vld [vmem:[%s300 + $0xc8] sm:$0xff]
        %v1895 = vld [vmem:[%s300 + $0xd0] sm:$0xff]
        %v1896 = vld [vmem:[%s300 + $0xd8] sm:$0xff]
        %v1897 = vld [vmem:[%s300 + $0xe0] sm:$0xff]
        %v1898 = vld [vmem:[%s300 + $0xe8] sm:$0xff]
        %v1899 = vld [vmem:[%s300 + $0xf0] sm:$0xff]
        %v1900 = vld [vmem:[%s300 + $0xf8] sm:$0xff]
        %v1901 = vmul.f32 %v1293, %v1837
        %v1902 = vmul.f32 %v1294, %v1838
        %v1903 = vmul.f32 %v1295, %v1839
        %v1904 = vmul.f32 %v1296, %v1840
        %v1905 = vmul.f32 %v1297, %v1841
        %v1906 = vmul.f32 %v1298, %v1842
        %v1907 = vmul.f32 %v1299, %v1843
        %v1908 = vmul.f32 %v1300, %v1844
        %v1909 = vmul.f32 %v1301, %v1845
        %v1910 = vmul.f32 %v1302, %v1846
        %v1911 = vmul.f32 %v1303, %v1847
        %v1912 = vmul.f32 %v1304, %v1848
        %v1913 = vmul.f32 %v1305, %v1849
        %v1914 = vmul.f32 %v1306, %v1850
        %v1915 = vmul.f32 %v1307, %v1851
        %v1916 = vmul.f32 %v1308, %v1852
        %v1917 = vmul.f32 %v1309, %v1853
        %v1918 = vmul.f32 %v1310, %v1854
        %v1919 = vmul.f32 %v1311, %v1855
        %v1920 = vmul.f32 %v1312, %v1856
        %v1921 = vmul.f32 %v1313, %v1857
        %v1922 = vmul.f32 %v1314, %v1858
        %v1923 = vmul.f32 %v1315, %v1859
        %v1924 = vmul.f32 %v1316, %v1860
        %v1925 = vmul.f32 %v1317, %v1861
        %v1926 = vmul.f32 %v1318, %v1862
        %v1927 = vmul.f32 %v1319, %v1863
        %v1928 = vmul.f32 %v1320, %v1864
        %v1929 = vmul.f32 %v1321, %v1865
        %v1930 = vmul.f32 %v1322, %v1866
        %v1931 = vmul.f32 %v1323, %v1867
        %v1932 = vmul.f32 %v1324, %v1868
        %v1933 = vsub.f32 %v1869, %v1901
        %v1934 = vsub.f32 %v1870, %v1902
        %v1935 = vsub.f32 %v1871, %v1903
        %v1936 = vsub.f32 %v1872, %v1904
        %v1937 = vsub.f32 %v1873, %v1905
        %v1938 = vsub.f32 %v1874, %v1906
        %v1939 = vsub.f32 %v1875, %v1907
        %v1940 = vsub.f32 %v1876, %v1908
        %v1941 = vsub.f32 %v1877, %v1909
        %v1942 = vsub.f32 %v1878, %v1910
        %v1943 = vsub.f32 %v1879, %v1911
        %v1944 = vsub.f32 %v1880, %v1912
        %v1945 = vsub.f32 %v1881, %v1913
        %v1946 = vsub.f32 %v1882, %v1914
        %v1947 = vsub.f32 %v1883, %v1915
        %v1948 = vsub.f32 %v1884, %v1916
        %v1949 = vsub.f32 %v1885, %v1917
        %v1950 = vsub.f32 %v1886, %v1918
        %v1951 = vsub.f32 %v1887, %v1919
        %v1952 = vsub.f32 %v1888, %v1920
        %v1953 = vsub.f32 %v1889, %v1921
        %v1954 = vsub.f32 %v1890, %v1922
        %v1955 = vsub.f32 %v1891, %v1923
        %v1956 = vsub.f32 %v1892, %v1924
        %v1957 = vsub.f32 %v1893, %v1925
        %v1958 = vsub.f32 %v1894, %v1926
        %v1959 = vsub.f32 %v1895, %v1927
        %v1960 = vsub.f32 %v1896, %v1928
        %v1961 = vsub.f32 %v1897, %v1929
        %v1962 = vsub.f32 %v1898, %v1930
        %v1963 = vsub.f32 %v1899, %v1931
        %v1964 = vsub.f32 %v1900, %v1932
        %1966 = vset.pattern.permute.xlu0 0
        %1967 = vperm.xlu0 %1966, %v1837
        %v1968 = vpop.permute.xlu0 %1967
        %1971 = vset.pattern.permute.xlu0 0
        %1972 = vperm.xlu0 %1971, %v1838
        %v1973 = vpop.permute.xlu0 %1972
        %1976 = vset.pattern.permute.xlu0 0
        %1977 = vperm.xlu0 %1976, %v1839
        %v1978 = vpop.permute.xlu0 %1977
        %1981 = vset.pattern.permute.xlu0 0
        %1982 = vperm.xlu0 %1981, %v1840
        %v1983 = vpop.permute.xlu0 %1982
        %1986 = vset.pattern.permute.xlu0 0
        %1987 = vperm.xlu0 %1986, %v1841
        %v1988 = vpop.permute.xlu0 %1987
        %1991 = vset.pattern.permute.xlu0 0
        %1992 = vperm.xlu0 %1991, %v1842
        %v1993 = vpop.permute.xlu0 %1992
        %1996 = vset.pattern.permute.xlu0 0
        %1997 = vperm.xlu0 %1996, %v1843
        %v1998 = vpop.permute.xlu0 %1997
        %2001 = vset.pattern.permute.xlu0 0
        %2002 = vperm.xlu0 %2001, %v1844
        %v2003 = vpop.permute.xlu0 %2002
        %2006 = vset.pattern.permute.xlu0 0
        %2007 = vperm.xlu0 %2006, %v1845
        %v2008 = vpop.permute.xlu0 %2007
        %2011 = vset.pattern.permute.xlu0 0
        %2012 = vperm.xlu0 %2011, %v1846
        %v2013 = vpop.permute.xlu0 %2012
        %2016 = vset.pattern.permute.xlu0 0
        %2017 = vperm.xlu0 %2016, %v1847
        %v2018 = vpop.permute.xlu0 %2017
        %2021 = vset.pattern.permute.xlu0 0
        %2022 = vperm.xlu0 %2021, %v1848
        %v2023 = vpop.permute.xlu0 %2022
        %2026 = vset.pattern.permute.xlu0 0
        %2027 = vperm.xlu0 %2026, %v1849
        %v2028 = vpop.permute.xlu0 %2027
        %2031 = vset.pattern.permute.xlu0 0
        %2032 = vperm.xlu0 %2031, %v1850
        %v2033 = vpop.permute.xlu0 %2032
        %2036 = vset.pattern.permute.xlu0 0
        %2037 = vperm.xlu0 %2036, %v1851
        %v2038 = vpop.permute.xlu0 %2037
        %2041 = vset.pattern.permute.xlu0 0
        %2042 = vperm.xlu0 %2041, %v1852
        %v2043 = vpop.permute.xlu0 %2042
        %2046 = vset.pattern.permute.xlu0 0
        %2047 = vperm.xlu0 %2046, %v1853
        %v2048 = vpop.permute.xlu0 %2047
        %2051 = vset.pattern.permute.xlu0 0
        %2052 = vperm.xlu0 %2051, %v1854
        %v2053 = vpop.permute.xlu0 %2052
        %2056 = vset.pattern.permute.xlu0 0
        %2057 = vperm.xlu0 %2056, %v1855
        %v2058 = vpop.permute.xlu0 %2057
        %2061 = vset.pattern.permute.xlu0 0
        %2062 = vperm.xlu0 %2061, %v1856
        %v2063 = vpop.permute.xlu0 %2062
        %2066 = vset.pattern.permute.xlu0 0
        %2067 = vperm.xlu0 %2066, %v1857
        %v2068 = vpop.permute.xlu0 %2067
        %2071 = vset.pattern.permute.xlu0 0
        %2072 = vperm.xlu0 %2071, %v1858
        %v2073 = vpop.permute.xlu0 %2072
        %2076 = vset.pattern.permute.xlu0 0
        %2077 = vperm.xlu0 %2076, %v1859
        %v2078 = vpop.permute.xlu0 %2077
        %2081 = vset.pattern.permute.xlu0 0
        %2082 = vperm.xlu0 %2081, %v1860
        %v2083 = vpop.permute.xlu0 %2082
        %2086 = vset.pattern.permute.xlu0 0
        %2087 = vperm.xlu0 %2086, %v1861
        %v2088 = vpop.permute.xlu0 %2087
        %2091 = vset.pattern.permute.xlu0 0
        %2092 = vperm.xlu0 %2091, %v1862
        %v2093 = vpop.permute.xlu0 %2092
        %2096 = vset.pattern.permute.xlu0 0
        %2097 = vperm.xlu0 %2096, %v1863
        %v2098 = vpop.permute.xlu0 %2097
        %2101 = vset.pattern.permute.xlu0 0
        %2102 = vperm.xlu0 %2101, %v1864
        %v2103 = vpop.permute.xlu0 %2102
        %2106 = vset.pattern.permute.xlu0 0
        %2107 = vperm.xlu0 %2106, %v1865
        %v2108 = vpop.permute.xlu0 %2107
        %2111 = vset.pattern.permute.xlu0 0
        %2112 = vperm.xlu0 %2111, %v1866
        %v2113 = vpop.permute.xlu0 %2112
        %2116 = vset.pattern.permute.xlu0 0
        %2117 = vperm.xlu0 %2116, %v1867
        %v2118 = vpop.permute.xlu0 %2117
        %2121 = vset.pattern.permute.xlu0 0
        %2122 = vperm.xlu0 %2121, %v1868
        %v2123 = vpop.permute.xlu0 %2122
        %v2125 = vmul.f32 %v989, %v1968
        %v2126 = vmul.f32 %v991, %v1973
        %v2127 = vmul.f32 %v994, %v1978
        %v2128 = vmul.f32 %v996, %v1983
        %v2129 = vmul.f32 %v999, %v1988
        %v2130 = vmul.f32 %v1001, %v1993
        %v2131 = vmul.f32 %v1004, %v1998
        %v2132 = vmul.f32 %v1006, %v2003
        %v2133 = vmul.f32 %v1009, %v2008
        %v2134 = vmul.f32 %v1011, %v2013
        %v2135 = vmul.f32 %v1014, %v2018
        %v2136 = vmul.f32 %v1016, %v2023
        %v2137 = vmul.f32 %v1019, %v2028
        %v2138 = vmul.f32 %v1021, %v2033
        %v2139 = vmul.f32 %v1024, %v2038
        %v2140 = vmul.f32 %v1026, %v2043
        %v2141 = vmul.f32 %v1029, %v2048
        %v2142 = vmul.f32 %v1031, %v2053
        %v2143 = vmul.f32 %v1034, %v2058
        %v2144 = vmul.f32 %v1036, %v2063
        %v2145 = vmul.f32 %v1039, %v2068
        %v2146 = vmul.f32 %v1041, %v2073
        %v2147 = vmul.f32 %v1044, %v2078
        %v2148 = vmul.f32 %v1046, %v2083
        %v2149 = vmul.f32 %v1049, %v2088
        %v2150 = vmul.f32 %v1051, %v2093
        %v2151 = vmul.f32 %v1054, %v2098
        %v2152 = vmul.f32 %v1056, %v2103
        %v2153 = vmul.f32 %v1059, %v2108
        %v2154 = vmul.f32 %v1061, %v2113
        %v2155 = vmul.f32 %v1064, %v2118
        %v2156 = vmul.f32 %v1066, %v2123
        %2158 = vset.pattern.permute.xlu0 0
        %2159 = vperm.xlu0 %2158, %v1933
        %v2160 = vpop.permute.xlu0 %2159
        %2163 = vset.pattern.permute.xlu0 0
        %2164 = vperm.xlu0 %2163, %v1934
        %v2165 = vpop.permute.xlu0 %2164
        %2168 = vset.pattern.permute.xlu0 0
        %2169 = vperm.xlu0 %2168, %v1935
        %v2170 = vpop.permute.xlu0 %2169
        %2173 = vset.pattern.permute.xlu0 0
        %2174 = vperm.xlu0 %2173, %v1936
        %v2175 = vpop.permute.xlu0 %2174
        %2178 = vset.pattern.permute.xlu0 0
        %2179 = vperm.xlu0 %2178, %v1937
        %v2180 = vpop.permute.xlu0 %2179
        %2183 = vset.pattern.permute.xlu0 0
        %2184 = vperm.xlu0 %2183, %v1938
        %v2185 = vpop.permute.xlu0 %2184
        %2188 = vset.pattern.permute.xlu0 0
        %2189 = vperm.xlu0 %2188, %v1939
        %v2190 = vpop.permute.xlu0 %2189
        %2193 = vset.pattern.permute.xlu0 0
        %2194 = vperm.xlu0 %2193, %v1940
        %v2195 = vpop.permute.xlu0 %2194
        %2198 = vset.pattern.permute.xlu0 0
        %2199 = vperm.xlu0 %2198, %v1941
        %v2200 = vpop.permute.xlu0 %2199
        %2203 = vset.pattern.permute.xlu0 0
        %2204 = vperm.xlu0 %2203, %v1942
        %v2205 = vpop.permute.xlu0 %2204
        %2208 = vset.pattern.permute.xlu0 0
        %2209 = vperm.xlu0 %2208, %v1943
        %v2210 = vpop.permute.xlu0 %2209
        %2213 = vset.pattern.permute.xlu0 0
        %2214 = vperm.xlu0 %2213, %v1944
        %v2215 = vpop.permute.xlu0 %2214
        %2218 = vset.pattern.permute.xlu0 0
        %2219 = vperm.xlu0 %2218, %v1945
        %v2220 = vpop.permute.xlu0 %2219
        %2223 = vset.pattern.permute.xlu0 0
        %2224 = vperm.xlu0 %2223, %v1946
        %v2225 = vpop.permute.xlu0 %2224
        %2228 = vset.pattern.permute.xlu0 0
        %2229 = vperm.xlu0 %2228, %v1947
        %v2230 = vpop.permute.xlu0 %2229
        %2233 = vset.pattern.permute.xlu0 0
        %2234 = vperm.xlu0 %2233, %v1948
        %v2235 = vpop.permute.xlu0 %2234
        %2238 = vset.pattern.permute.xlu0 0
        %2239 = vperm.xlu0 %2238, %v1949
        %v2240 = vpop.permute.xlu0 %2239
        %2243 = vset.pattern.permute.xlu0 0
        %2244 = vperm.xlu0 %2243, %v1950
        %v2245 = vpop.permute.xlu0 %2244
        %2248 = vset.pattern.permute.xlu0 0
        %2249 = vperm.xlu0 %2248, %v1951
        %v2250 = vpop.permute.xlu0 %2249
        %2253 = vset.pattern.permute.xlu0 0
        %2254 = vperm.xlu0 %2253, %v1952
        %v2255 = vpop.permute.xlu0 %2254
        %2258 = vset.pattern.permute.xlu0 0
        %2259 = vperm.xlu0 %2258, %v1953
        %v2260 = vpop.permute.xlu0 %2259
        %2263 = vset.pattern.permute.xlu0 0
        %2264 = vperm.xlu0 %2263, %v1954
        %v2265 = vpop.permute.xlu0 %2264
        %2268 = vset.pattern.permute.xlu0 0
        %2269 = vperm.xlu0 %2268, %v1955
        %v2270 = vpop.permute.xlu0 %2269
        %2273 = vset.pattern.permute.xlu0 0
        %2274 = vperm.xlu0 %2273, %v1956
        %v2275 = vpop.permute.xlu0 %2274
        %2278 = vset.pattern.permute.xlu0 0
        %2279 = vperm.xlu0 %2278, %v1957
        %v2280 = vpop.permute.xlu0 %2279
        %2283 = vset.pattern.permute.xlu0 0
        %2284 = vperm.xlu0 %2283, %v1958
        %v2285 = vpop.permute.xlu0 %2284
        %2288 = vset.pattern.permute.xlu0 0
        %2289 = vperm.xlu0 %2288, %v1959
        %v2290 = vpop.permute.xlu0 %2289
        %2293 = vset.pattern.permute.xlu0 0
        %2294 = vperm.xlu0 %2293, %v1960
        %v2295 = vpop.permute.xlu0 %2294
        %2298 = vset.pattern.permute.xlu0 0
        %2299 = vperm.xlu0 %2298, %v1961
        %v2300 = vpop.permute.xlu0 %2299
        %2303 = vset.pattern.permute.xlu0 0
        %2304 = vperm.xlu0 %2303, %v1962
        %v2305 = vpop.permute.xlu0 %2304
        %2308 = vset.pattern.permute.xlu0 0
        %2309 = vperm.xlu0 %2308, %v1963
        %v2310 = vpop.permute.xlu0 %2309
        %2313 = vset.pattern.permute.xlu0 0
        %2314 = vperm.xlu0 %2313, %v1964
        %v2315 = vpop.permute.xlu0 %2314
        %v2317 = vadd.f32 %v2125, %v2160
        %v2318 = vadd.f32 %v2126, %v2165
        %v2319 = vadd.f32 %v2127, %v2170
        %v2320 = vadd.f32 %v2128, %v2175
        %v2321 = vadd.f32 %v2129, %v2180
        %v2322 = vadd.f32 %v2130, %v2185
        %v2323 = vadd.f32 %v2131, %v2190
        %v2324 = vadd.f32 %v2132, %v2195
        %v2325 = vadd.f32 %v2133, %v2200
        %v2326 = vadd.f32 %v2134, %v2205
        %v2327 = vadd.f32 %v2135, %v2210
        %v2328 = vadd.f32 %v2136, %v2215
        %v2329 = vadd.f32 %v2137, %v2220
        %v2330 = vadd.f32 %v2138, %v2225
        %v2331 = vadd.f32 %v2139, %v2230
        %v2332 = vadd.f32 %v2140, %v2235
        %v2333 = vadd.f32 %v2141, %v2240
        %v2334 = vadd.f32 %v2142, %v2245
        %v2335 = vadd.f32 %v2143, %v2250
        %v2336 = vadd.f32 %v2144, %v2255
        %v2337 = vadd.f32 %v2145, %v2260
        %v2338 = vadd.f32 %v2146, %v2265
        %v2339 = vadd.f32 %v2147, %v2270
        %v2340 = vadd.f32 %v2148, %v2275
        %v2341 = vadd.f32 %v2149, %v2280
        %v2342 = vadd.f32 %v2150, %v2285
        %v2343 = vadd.f32 %v2151, %v2290
        %v2344 = vadd.f32 %v2152, %v2295
        %v2345 = vadd.f32 %v2153, %v2300
        %v2346 = vadd.f32 %v2154, %v2305
        %v2347 = vadd.f32 %v2155, %v2310
        %v2348 = vadd.f32 %v2156, %v2315
        %2349 = vst.msk [vmem:[%s260] sm:$0xff] %vm1068, %v2317
        %2350 = vst.msk [vmem:[%s260 + $0x8] sm:$0xff] %vm1068, %v2318
        %2351 = vst.msk [vmem:[%s260 + $0x10] sm:$0xff] %vm1068, %v2319
        %2352 = vst.msk [vmem:[%s260 + $0x18] sm:$0xff] %vm1068, %v2320
        %2353 = vst.msk [vmem:[%s260 + $0x20] sm:$0xff] %vm1068, %v2321
        %2354 = vst.msk [vmem:[%s260 + $0x28] sm:$0xff] %vm1068, %v2322
        %2355 = vst.msk [vmem:[%s260 + $0x30] sm:$0xff] %vm1068, %v2323
        %2356 = vst.msk [vmem:[%s260 + $0x38] sm:$0xff] %vm1068, %v2324
        %2357 = vst.msk [vmem:[%s260 + $0x40] sm:$0xff] %vm1068, %v2325
        %2358 = vst.msk [vmem:[%s260 + $0x48] sm:$0xff] %vm1068, %v2326
        %2359 = vst.msk [vmem:[%s260 + $0x50] sm:$0xff] %vm1068, %v2327
        %2360 = vst.msk [vmem:[%s260 + $0x58] sm:$0xff] %vm1068, %v2328
        %2361 = vst.msk [vmem:[%s260 + $0x60] sm:$0xff] %vm1068, %v2329
        %2362 = vst.msk [vmem:[%s260 + $0x68] sm:$0xff] %vm1068, %v2330
        %2363 = vst.msk [vmem:[%s260 + $0x70] sm:$0xff] %vm1068, %v2331
        %2364 = vst.msk [vmem:[%s260 + $0x78] sm:$0xff] %vm1068, %v2332
        %2365 = vst.msk [vmem:[%s260 + $0x80] sm:$0xff] %vm1068, %v2333
        %2366 = vst.msk [vmem:[%s260 + $0x88] sm:$0xff] %vm1068, %v2334
        %2367 = vst.msk [vmem:[%s260 + $0x90] sm:$0xff] %vm1068, %v2335
        %2368 = vst.msk [vmem:[%s260 + $0x98] sm:$0xff] %vm1068, %v2336
        %2369 = vst.msk [vmem:[%s260 + $0xa0] sm:$0xff] %vm1068, %v2337
        %2370 = vst.msk [vmem:[%s260 + $0xa8] sm:$0xff] %vm1068, %v2338
        %2371 = vst.msk [vmem:[%s260 + $0xb0] sm:$0xff] %vm1068, %v2339
        %2372 = vst.msk [vmem:[%s260 + $0xb8] sm:$0xff] %vm1068, %v2340
        %2373 = vst.msk [vmem:[%s260 + $0xc0] sm:$0xff] %vm1068, %v2341
        %2374 = vst.msk [vmem:[%s260 + $0xc8] sm:$0xff] %vm1068, %v2342
        %2375 = vst.msk [vmem:[%s260 + $0xd0] sm:$0xff] %vm1068, %v2343
        %2376 = vst.msk [vmem:[%s260 + $0xd8] sm:$0xff] %vm1068, %v2344
        %2377 = vst.msk [vmem:[%s260 + $0xe0] sm:$0xff] %vm1068, %v2345
        %2378 = vst.msk [vmem:[%s260 + $0xe8] sm:$0xff] %vm1068, %v2346
        %2379 = vst.msk [vmem:[%s260 + $0xf0] sm:$0xff] %vm1068, %v2347
        %2380 = vst.msk [vmem:[%s260 + $0xf8] sm:$0xff] %vm1068, %v2348
        %s2381 = sand.u32 %s122, 1
        %s2382 = sand.u32 %s122, 1
        %s2383 = smul.addr %s2382, 256
        %s2384 = scalar_lea.vmem [#allocation2], %s2383
        // Predicated region
        $region37: #{tpu_custom_call.1} parent=35 // pred_check
          %p2385 = pneg %p132
        $region38: #{tpu_custom_call.1} parent=35 // pred_check_branch
          %2387 = sbr.rel (%p2385) target = $region40
        $region39: #{tpu_custom_call.1} parent=35 // pred_region
          %s2388 = smul.u32 32, %s15
          %s2389 = ssub.s32 204, %s2388
          %p2390 = scmp.lt.s32.totalorder %s2389, 32
          %s2391 = scalar_select %p2390, %s2389, 32
          %s2392 = smul.u32 8, %s2391
          %p2393 = scmp.ne.s32.totalorder 0, %s2392
          %s2394 = smul.addr %s2388, 8
          %s2395 = scalar_lea.vmem %s4, %s2394
          // Predicated region
          $region41: #{tpu_custom_call.1} parent=39 // pred_check
            %p2396 = pneg %p2393
          $region42: #{tpu_custom_call.1} parent=39 // pred_check_branch
            %2398 = sbr.rel (%p2396) target = $region44
          $region43: #{tpu_custom_call.1} parent=39 // pred_region
            // Predicated region
            $region45: #{tpu_custom_call.1} parent=43 // pred_check
              _
            $region46: #{tpu_custom_call.1} parent=43 // pred_check_branch
              %2400 = sbr.rel (0) target = $region48
            $region47: #{tpu_custom_call.1} parent=43 // pred_region
              // Predicated region
              $region67: #{tpu_custom_call.1} parent=47 // pred_check
                _
              $region68: #{tpu_custom_call.1} parent=47 // pred_check_branch
                %2512 = sbr.rel (0) target = $region70
              $region69: #{tpu_custom_call.1} parent=47 // pred_region
                %s2513 = sshrl.u32 %s2391, 5
                // While loop
                $region71: #{tpu_custom_call.1} parent=69 // loop_pre_header
                  _
                $region72: #{tpu_custom_call.1} parent=69 // loop_header
                  %s2515 = sphi 0, %s2517
                  %p2516 = scmp.ge.s32.totalorder %s2515, %s2513
                  %s2520 = sphi 0, %s2589
                  %s2521 = sphi %s2384, %s2592
                  %s2522 = sphi %s2395, %s2593
                $region73: #{tpu_custom_call.1} parent=69 // loop_header_branch
                  %2519 = sbr.rel (%p2516) target = $region77
                $region74: #{tpu_custom_call.1} parent=69 // loop_body
                  %v2523 = vld [vmem:[%s2521] sm:$0xff]
                  %2524 = vst [vmem:[%s2522] sm:$0xff] %v2523
                  %v2525 = vld [vmem:[%s2521 + $0x8] sm:$0xff]
                  %2526 = vst [vmem:[%s2522 + $0x8] sm:$0xff] %v2525
                  %v2527 = vld [vmem:[%s2521 + $0x10] sm:$0xff]
                  %2528 = vst [vmem:[%s2522 + $0x10] sm:$0xff] %v2527
                  %v2529 = vld [vmem:[%s2521 + $0x18] sm:$0xff]
                  %2530 = vst [vmem:[%s2522 + $0x18] sm:$0xff] %v2529
                  %v2531 = vld [vmem:[%s2521 + $0x20] sm:$0xff]
                  %2532 = vst [vmem:[%s2522 + $0x20] sm:$0xff] %v2531
                  %v2533 = vld [vmem:[%s2521 + $0x28] sm:$0xff]
                  %2534 = vst [vmem:[%s2522 + $0x28] sm:$0xff] %v2533
                  %v2535 = vld [vmem:[%s2521 + $0x30] sm:$0xff]
                  %2536 = vst [vmem:[%s2522 + $0x30] sm:$0xff] %v2535
                  %v2537 = vld [vmem:[%s2521 + $0x38] sm:$0xff]
                  %2538 = vst [vmem:[%s2522 + $0x38] sm:$0xff] %v2537
                  %v2539 = vld [vmem:[%s2521 + $0x40] sm:$0xff]
                  %2540 = vst [vmem:[%s2522 + $0x40] sm:$0xff] %v2539
                  %v2541 = vld [vmem:[%s2521 + $0x48] sm:$0xff]
                  %2542 = vst [vmem:[%s2522 + $0x48] sm:$0xff] %v2541
                  %v2543 = vld [vmem:[%s2521 + $0x50] sm:$0xff]
                  %2544 = vst [vmem:[%s2522 + $0x50] sm:$0xff] %v2543
                  %v2545 = vld [vmem:[%s2521 + $0x58] sm:$0xff]
                  %2546 = vst [vmem:[%s2522 + $0x58] sm:$0xff] %v2545
                  %v2547 = vld [vmem:[%s2521 + $0x60] sm:$0xff]
                  %2548 = vst [vmem:[%s2522 + $0x60] sm:$0xff] %v2547
                  %v2549 = vld [vmem:[%s2521 + $0x68] sm:$0xff]
                  %2550 = vst [vmem:[%s2522 + $0x68] sm:$0xff] %v2549
                  %v2551 = vld [vmem:[%s2521 + $0x70] sm:$0xff]
                  %2552 = vst [vmem:[%s2522 + $0x70] sm:$0xff] %v2551
                  %v2553 = vld [vmem:[%s2521 + $0x78] sm:$0xff]
                  %2554 = vst [vmem:[%s2522 + $0x78] sm:$0xff] %v2553
                  %v2555 = vld [vmem:[%s2521 + $0x80] sm:$0xff]
                  %2556 = vst [vmem:[%s2522 + $0x80] sm:$0xff] %v2555
                  %v2557 = vld [vmem:[%s2521 + $0x88] sm:$0xff]
                  %2558 = vst [vmem:[%s2522 + $0x88] sm:$0xff] %v2557
                  %v2559 = vld [vmem:[%s2521 + $0x90] sm:$0xff]
                  %2560 = vst [vmem:[%s2522 + $0x90] sm:$0xff] %v2559
                  %v2561 = vld [vmem:[%s2521 + $0x98] sm:$0xff]
                  %2562 = vst [vmem:[%s2522 + $0x98] sm:$0xff] %v2561
                  %v2563 = vld [vmem:[%s2521 + $0xa0] sm:$0xff]
                  %2564 = vst [vmem:[%s2522 + $0xa0] sm:$0xff] %v2563
                  %v2565 = vld [vmem:[%s2521 + $0xa8] sm:$0xff]
                  %2566 = vst [vmem:[%s2522 + $0xa8] sm:$0xff] %v2565
                  %v2567 = vld [vmem:[%s2521 + $0xb0] sm:$0xff]
                  %2568 = vst [vmem:[%s2522 + $0xb0] sm:$0xff] %v2567
                  %v2569 = vld [vmem:[%s2521 + $0xb8] sm:$0xff]
                  %2570 = vst [vmem:[%s2522 + $0xb8] sm:$0xff] %v2569
                  %v2571 = vld [vmem:[%s2521 + $0xc0] sm:$0xff]
                  %2572 = vst [vmem:[%s2522 + $0xc0] sm:$0xff] %v2571
                  %v2573 = vld [vmem:[%s2521 + $0xc8] sm:$0xff]
                  %2574 = vst [vmem:[%s2522 + $0xc8] sm:$0xff] %v2573
                  %v2575 = vld [vmem:[%s2521 + $0xd0] sm:$0xff]
                  %2576 = vst [vmem:[%s2522 + $0xd0] sm:$0xff] %v2575
                  %v2577 = vld [vmem:[%s2521 + $0xd8] sm:$0xff]
                  %2578 = vst [vmem:[%s2522 + $0xd8] sm:$0xff] %v2577
                  %v2579 = vld [vmem:[%s2521 + $0xe0] sm:$0xff]
                  %2580 = vst [vmem:[%s2522 + $0xe0] sm:$0xff] %v2579
                  %v2581 = vld [vmem:[%s2521 + $0xe8] sm:$0xff]
                  %2582 = vst [vmem:[%s2522 + $0xe8] sm:$0xff] %v2581
                  %v2583 = vld [vmem:[%s2521 + $0xf0] sm:$0xff]
                  %2584 = vst [vmem:[%s2522 + $0xf0] sm:$0xff] %v2583
                  %v2585 = vld [vmem:[%s2521 + $0xf8] sm:$0xff]
                  %2586 = vst [vmem:[%s2522 + $0xf8] sm:$0xff] %v2585
                  %s2587 = sadd.s32 1, %s2520
                  %p2588 = scmp.ge.s32.totalorder %s2587, %s2513
                  %s2589 = scalar_select %p2588, 0, %s2587
                  %s2590 = smul.u32 %s2589, 256
                  %s2591 = smul.u32 %s2589, 256
                  %s2592 = scalar_lea.vmem %s2384, %s2590 [#allocation2]
                  %s2593 = scalar_lea.vmem %s2395, %s2591
                $region75: #{tpu_custom_call.1} parent=69 // loop_footer
                  %s2517 = sadd.s32 %s2515, 1
                $region76: #{tpu_custom_call.1} parent=69 // loop_footer_branch
                  %2514 = sbr.rel target = $region72
                $region77: #{tpu_custom_call.1} parent=69 // loop_exit
                  _
                %s2594 = sshrl.u32 %s2391, 5
                %s2595 = sand.u32 %s2391, 31
                %s2596 = smul.u32 %s2594, 32
                %s2597 = smul.u32 8, %s2596
                %s2598 = scalar_lea.vmem %s2384, %s2597 [#allocation2]
                %s2599 = smul.u32 8, %s2596
                %s2600 = scalar_lea.vmem %s2395, %s2599
                // While loop
                $region78: #{tpu_custom_call.1} parent=69 // loop_pre_header
                  _
                $region79: #{tpu_custom_call.1} parent=69 // loop_header
                  %s2602 = sphi 0, %s2604
                  %p2603 = scmp.ge.s32.totalorder %s2602, %s2595
                  %s2607 = sphi 0, %s2614
                  %s2608 = sphi %s2598, %s2617
                  %s2609 = sphi %s2600, %s2618
                $region80: #{tpu_custom_call.1} parent=69 // loop_header_branch
                  %2606 = sbr.rel (%p2603) target = $region84
                $region81: #{tpu_custom_call.1} parent=69 // loop_body
                  %v2610 = vld [vmem:[%s2608] sm:$0xff]
                  %2611 = vst [vmem:[%s2609] sm:$0xff] %v2610
                  %s2612 = sadd.s32 1, %s2607
                  %p2613 = scmp.ge.s32.totalorder %s2612, %s2595
                  %s2614 = scalar_select %p2613, 0, %s2612
                  %s2615 = smul.u32 %s2614, 8
                  %s2616 = smul.u32 %s2614, 8
                  %s2617 = scalar_lea.vmem %s2598, %s2615 [#allocation2]
                  %s2618 = scalar_lea.vmem %s2600, %s2616
                $region82: #{tpu_custom_call.1} parent=69 // loop_footer
                  %s2604 = sadd.s32 %s2602, 1
                $region83: #{tpu_custom_call.1} parent=69 // loop_footer_branch
                  %2601 = sbr.rel target = $region79
                $region84: #{tpu_custom_call.1} parent=69 // loop_exit
                  _
              $region70: #{tpu_custom_call.1} parent=47 // pred_fallthru
                _
              // Predicated region
              $region85: #{tpu_custom_call.1} parent=47 // pred_check
                _
              $region86: #{tpu_custom_call.1} parent=47 // pred_check_branch
                %2620 = sbr.rel target = $region88
              $region87: #{tpu_custom_call.1} parent=47 // pred_region
                _
              $region88: #{tpu_custom_call.1} parent=47 // pred_fallthru
                _
            $region48: #{tpu_custom_call.1} parent=43 // pred_fallthru
              _
            // Predicated region
            $region49: #{tpu_custom_call.1} parent=43 // pred_check
              _
            $region50: #{tpu_custom_call.1} parent=43 // pred_check_branch
              %2402 = sbr.rel target = $region52
            $region51: #{tpu_custom_call.1} parent=43 // pred_region
              %s2404 = ssub.s32 256, 1
              %s2405 = sshrl.u32 %s2391, 5
              // While loop
              $region53: #{tpu_custom_call.1} parent=51 // loop_pre_header
                _
              $region54: #{tpu_custom_call.1} parent=51 // loop_header
                %s2407 = sphi 0, %s2409
                %p2408 = scmp.ge.s32.totalorder %s2407, %s2405
                %s2412 = sphi 0, %s2481
                %s2413 = sphi %s2384, %s2484
                %s2414 = sphi %s2395, %s2485
              $region55: #{tpu_custom_call.1} parent=51 // loop_header_branch
                %2411 = sbr.rel (%p2408) target = $region59
              $region56: #{tpu_custom_call.1} parent=51 // loop_body
                %v2415 = vld [vmem:[%s2413] sm:%s2404]
                %2416 = vst [vmem:[%s2414] sm:%s2404] %v2415
                %v2417 = vld [vmem:[%s2413 + $0x8] sm:%s2404]
                %2418 = vst [vmem:[%s2414 + $0x8] sm:%s2404] %v2417
                %v2419 = vld [vmem:[%s2413 + $0x10] sm:%s2404]
                %2420 = vst [vmem:[%s2414 + $0x10] sm:%s2404] %v2419
                %v2421 = vld [vmem:[%s2413 + $0x18] sm:%s2404]
                %2422 = vst [vmem:[%s2414 + $0x18] sm:%s2404] %v2421
                %v2423 = vld [vmem:[%s2413 + $0x20] sm:%s2404]
                %2424 = vst [vmem:[%s2414 + $0x20] sm:%s2404] %v2423
                %v2425 = vld [vmem:[%s2413 + $0x28] sm:%s2404]
                %2426 = vst [vmem:[%s2414 + $0x28] sm:%s2404] %v2425
                %v2427 = vld [vmem:[%s2413 + $0x30] sm:%s2404]
                %2428 = vst [vmem:[%s2414 + $0x30] sm:%s2404] %v2427
                %v2429 = vld [vmem:[%s2413 + $0x38] sm:%s2404]
                %2430 = vst [vmem:[%s2414 + $0x38] sm:%s2404] %v2429
                %v2431 = vld [vmem:[%s2413 + $0x40] sm:%s2404]
                %2432 = vst [vmem:[%s2414 + $0x40] sm:%s2404] %v2431
                %v2433 = vld [vmem:[%s2413 + $0x48] sm:%s2404]
                %2434 = vst [vmem:[%s2414 + $0x48] sm:%s2404] %v2433
                %v2435 = vld [vmem:[%s2413 + $0x50] sm:%s2404]
                %2436 = vst [vmem:[%s2414 + $0x50] sm:%s2404] %v2435
                %v2437 = vld [vmem:[%s2413 + $0x58] sm:%s2404]
                %2438 = vst [vmem:[%s2414 + $0x58] sm:%s2404] %v2437
                %v2439 = vld [vmem:[%s2413 + $0x60] sm:%s2404]
                %2440 = vst [vmem:[%s2414 + $0x60] sm:%s2404] %v2439
                %v2441 = vld [vmem:[%s2413 + $0x68] sm:%s2404]
                %2442 = vst [vmem:[%s2414 + $0x68] sm:%s2404] %v2441
                %v2443 = vld [vmem:[%s2413 + $0x70] sm:%s2404]
                %2444 = vst [vmem:[%s2414 + $0x70] sm:%s2404] %v2443
                %v2445 = vld [vmem:[%s2413 + $0x78] sm:%s2404]
                %2446 = vst [vmem:[%s2414 + $0x78] sm:%s2404] %v2445
                %v2447 = vld [vmem:[%s2413 + $0x80] sm:%s2404]
                %2448 = vst [vmem:[%s2414 + $0x80] sm:%s2404] %v2447
                %v2449 = vld [vmem:[%s2413 + $0x88] sm:%s2404]
                %2450 = vst [vmem:[%s2414 + $0x88] sm:%s2404] %v2449
                %v2451 = vld [vmem:[%s2413 + $0x90] sm:%s2404]
                %2452 = vst [vmem:[%s2414 + $0x90] sm:%s2404] %v2451
                %v2453 = vld [vmem:[%s2413 + $0x98] sm:%s2404]
                %2454 = vst [vmem:[%s2414 + $0x98] sm:%s2404] %v2453
                %v2455 = vld [vmem:[%s2413 + $0xa0] sm:%s2404]
                %2456 = vst [vmem:[%s2414 + $0xa0] sm:%s2404] %v2455
                %v2457 = vld [vmem:[%s2413 + $0xa8] sm:%s2404]
                %2458 = vst [vmem:[%s2414 + $0xa8] sm:%s2404] %v2457
                %v2459 = vld [vmem:[%s2413 + $0xb0] sm:%s2404]
                %2460 = vst [vmem:[%s2414 + $0xb0] sm:%s2404] %v2459
                %v2461 = vld [vmem:[%s2413 + $0xb8] sm:%s2404]
                %2462 = vst [vmem:[%s2414 + $0xb8] sm:%s2404] %v2461
                %v2463 = vld [vmem:[%s2413 + $0xc0] sm:%s2404]
                %2464 = vst [vmem:[%s2414 + $0xc0] sm:%s2404] %v2463
                %v2465 = vld [vmem:[%s2413 + $0xc8] sm:%s2404]
                %2466 = vst [vmem:[%s2414 + $0xc8] sm:%s2404] %v2465
                %v2467 = vld [vmem:[%s2413 + $0xd0] sm:%s2404]
                %2468 = vst [vmem:[%s2414 + $0xd0] sm:%s2404] %v2467
                %v2469 = vld [vmem:[%s2413 + $0xd8] sm:%s2404]
                %2470 = vst [vmem:[%s2414 + $0xd8] sm:%s2404] %v2469
                %v2471 = vld [vmem:[%s2413 + $0xe0] sm:%s2404]
                %2472 = vst [vmem:[%s2414 + $0xe0] sm:%s2404] %v2471
                %v2473 = vld [vmem:[%s2413 + $0xe8] sm:%s2404]
                %2474 = vst [vmem:[%s2414 + $0xe8] sm:%s2404] %v2473
                %v2475 = vld [vmem:[%s2413 + $0xf0] sm:%s2404]
                %2476 = vst [vmem:[%s2414 + $0xf0] sm:%s2404] %v2475
                %v2477 = vld [vmem:[%s2413 + $0xf8] sm:%s2404]
                %2478 = vst [vmem:[%s2414 + $0xf8] sm:%s2404] %v2477
                %s2479 = sadd.s32 1, %s2412
                %p2480 = scmp.ge.s32.totalorder %s2479, %s2405
                %s2481 = scalar_select %p2480, 0, %s2479
                %s2482 = smul.u32 %s2481, 256
                %s2483 = smul.u32 %s2481, 256
                %s2484 = scalar_lea.vmem %s2384, %s2482 [#allocation2]
                %s2485 = scalar_lea.vmem %s2395, %s2483
              $region57: #{tpu_custom_call.1} parent=51 // loop_footer
                %s2409 = sadd.s32 %s2407, 1
              $region58: #{tpu_custom_call.1} parent=51 // loop_footer_branch
                %2406 = sbr.rel target = $region54
              $region59: #{tpu_custom_call.1} parent=51 // loop_exit
                _
              %s2486 = sshrl.u32 %s2391, 5
              %s2487 = sand.u32 %s2391, 31
              %s2488 = smul.u32 %s2486, 32
              %s2489 = smul.u32 8, %s2488
              %s2490 = scalar_lea.vmem %s2384, %s2489 [#allocation2]
              %s2491 = smul.u32 8, %s2488
              %s2492 = scalar_lea.vmem %s2395, %s2491
              // While loop
              $region60: #{tpu_custom_call.1} parent=51 // loop_pre_header
                _
              $region61: #{tpu_custom_call.1} parent=51 // loop_header
                %s2494 = sphi 0, %s2496
                %p2495 = scmp.ge.s32.totalorder %s2494, %s2487
                %s2499 = sphi 0, %s2506
                %s2500 = sphi %s2490, %s2509
                %s2501 = sphi %s2492, %s2510
              $region62: #{tpu_custom_call.1} parent=51 // loop_header_branch
                %2498 = sbr.rel (%p2495) target = $region66
              $region63: #{tpu_custom_call.1} parent=51 // loop_body
                %v2502 = vld [vmem:[%s2500] sm:%s2404]
                %2503 = vst [vmem:[%s2501] sm:%s2404] %v2502
                %s2504 = sadd.s32 1, %s2499
                %p2505 = scmp.ge.s32.totalorder %s2504, %s2487
                %s2506 = scalar_select %p2505, 0, %s2504
                %s2507 = smul.u32 %s2506, 8
                %s2508 = smul.u32 %s2506, 8
                %s2509 = scalar_lea.vmem %s2490, %s2507 [#allocation2]
                %s2510 = scalar_lea.vmem %s2492, %s2508
              $region64: #{tpu_custom_call.1} parent=51 // loop_footer
                %s2496 = sadd.s32 %s2494, 1
              $region65: #{tpu_custom_call.1} parent=51 // loop_footer_branch
                %2493 = sbr.rel target = $region61
              $region66: #{tpu_custom_call.1} parent=51 // loop_exit
                _
            $region52: #{tpu_custom_call.1} parent=43 // pred_fallthru
              _
          $region44: #{tpu_custom_call.1} parent=39 // pred_fallthru
            _
          %2621 = vnop
        $region40: #{tpu_custom_call.1} parent=35 // pred_fallthru
          _
      $region36: #{tpu_custom_call.1} parent=5 // pred_fallthru
        _
      %p2622 = scmp.le.s32.totalorder 2, %s10
      // Predicated region
      $region89: #{tpu_custom_call.1} parent=5 // pred_check
        %p2623 = pneg %p2622
      $region90: #{tpu_custom_call.1} parent=5 // pred_check_branch
        %2625 = sbr.rel (%p2623) target = $region92
      $region91: #{tpu_custom_call.1} parent=5 // pred_region
        %s2626 = ssub.s32 %s10, 2
        // Predicated region
        $region93: #{tpu_custom_call.1} parent=91 // pred_check
          %p2627 = pneg %p138
        $region94: #{tpu_custom_call.1} parent=91 // pred_check_branch
          %2629 = sbr.rel (%p2627) target = $region96
        $region95: #{tpu_custom_call.1} parent=91 // pred_region
          %s2630 = sand.u32 %s123, 1
          %s2631 = sand.u32 %s123, 1
          %s2632 = smul.addr %s2631, 256
          %s2633 = scalar_lea.vmem [#allocation2], %s2632
        $region96: #{tpu_custom_call.1} parent=91 // pred_fallthru
          _
      $region92: #{tpu_custom_call.1} parent=5 // pred_fallthru
        _
    $region6: #{tpu_custom_call.1} parent=1 // loop_footer
      %s14 = sadd.s32 1, %s10
    $region7: #{tpu_custom_call.1} parent=1 // loop_footer_branch
      %9 = sbr.rel target = $region3
    $region8: #{tpu_custom_call.1} parent=1 // loop_exit
      _

</llo_original>
